<compile_context>
chip_gen: v5e
topology: v5e:2x2
jax: 0.10.0
libtpu: 0.0.40
codegen_flags: <defaults>
</compile_context>

<pallas_src>
import numpy as np
import jax
import jax.numpy as jnp
from jax.experimental import pallas as pl
from jax.experimental.pallas import tpu as pltpu

LANE = 128
N_HEADS = 5
PT = (0.0, 0.2, 0.4, 0.6, 0.8, 1.0)
NEG_BIG = -1e30  # padding value for density-head bias -> exp underflows to 0


def _round_up(v, m):
    return ((v + m - 1) // m) * m


def _act(x, name):
    if name == "relu":
        return jnp.maximum(x, 0.0)
    if name == "tanh":
        return jnp.tanh(x)
    if name == "sigmoid":
        return jax.nn.sigmoid(x)
    return x  # 'id' / anything else -> no activation


# ----------------------------------------------------------------------------
# Kernel factory
# ----------------------------------------------------------------------------
def _make_drnet_kernel(d_layers, q_layers, num_grid, grid_pad, outdim,
                       last_vpu, fuse_l0, mm_dtype):
    nq = len(q_layers)

    def kernel(th_ref, x_ref, *refs):
        del th_ref  # head routing happens in the BlockSpec index_maps
        out_ref = refs[-1]
        prefs = refs[:-1]
        pos = 0

        def nxt():
            nonlocal pos
            r = prefs[pos]
            pos += 1
            return r

        xin = x_ref[...]                # (tb, in_pad) f32; dose lives in lane 0
        t = xin[:, 0:1]                 # (tb, 1)

        # ---- hidden_features stack (Linear + act), statically unrolled
        feat = xin
        for (act, isbias) in d_layers:
            W = nxt()[...]              # (ip, op) bf16
            o = jnp.dot(feat.astype(mm_dtype), W,
                        preferred_element_type=jnp.float32)
            if isbias:
                o = o + nxt()[...]
            feat = _act(o, act)
        hidden = feat                   # (tb, hid_pad) f32
        hidden_mm = hidden.astype(mm_dtype)

        # ---- density head (fused with the head's first Treat_Linear matmul)
        if fuse_l0:
            Wbig = nxt()[0]             # (hid_pad, grid_pad + op0), head slice
            big = jnp.dot(hidden_mm, Wbig, preferred_element_type=jnp.float32)
            logits = big[:, :grid_pad]
            o0 = big[:, grid_pad:]
        else:
            Wd = nxt()[...]
            logits = jnp.dot(hidden_mm, Wd, preferred_element_type=jnp.float32)
            o0 = None
        logits = logits + nxt()[...]    # density bias; pad lanes hold NEG_BIG

        m = jnp.max(logits, axis=-1, keepdims=True)
        e = jnp.exp(logits - m)
        esum = jnp.sum(e, axis=-1, keepdims=True)
        tg = t * float(num_grid)
        U = jnp.ceil(tg)
        inter = 1.0 - (U - tg)
        L = U - 1.0
        L = jnp.where(L < 0.0, L + 1.0, L)
        coli = jax.lax.broadcasted_iota(jnp.int32, e.shape, 1)
        Li = L.astype(jnp.int32)
        Ui = U.astype(jnp.int32)
        w = (jnp.where(coli == Li, 1.0 - inter, 0.0) +
             jnp.where(coli == Ui, inter, 0.0))
        g = jnp.sum(e * w, axis=-1, keepdims=True) / esum   # (tb, 1)

        # ---- Treat_Linear stack of this tile's head only
        hf = hidden
        for l, (act, istreat, isbias) in enumerate(q_layers):
            is_last = (l == nq - 1)
            if l == 0 and fuse_l0:
                o = o0
            elif is_last and last_vpu:
                wrow = nxt()[0]         # (1, ip) f32 -> VPU mul + lane reduce
                o = jnp.sum(hf * wrow, axis=-1, keepdims=True)
            else:
                W = nxt()[0]            # (ip, opw) bf16, head slice
                o = jnp.dot(hf.astype(mm_dtype), W,
                            preferred_element_type=jnp.float32)
            if istreat:
                tw = nxt()[0]           # (1, opw) f32
                if is_last and last_vpu:
                    tw = tw[:, 0:1]
                o = o + t * tw          # VPU broadcast, not a K=1 matmul
            if isbias:
                b = nxt()[0]
                if is_last and last_vpu:
                    b = b[:, 0:1]
                o = o + b
            hf = _act(o, act)

        # ---- pack Q (lanes [0:outdim]) and g (lane outdim) into one slab
        ocol = jax.lax.broadcasted_iota(jnp.int32, out_ref.shape, 1)
        if last_vpu:
            packed = jnp.where(ocol == 0, hf, 0.0)
        else:
            packed = hf
        out_ref[...] = jnp.where(ocol == outdim, g, packed)

    return kernel


# ----------------------------------------------------------------------------
# Wrapper: head grouping, padding, specs, pallas_call
# ----------------------------------------------------------------------------
def drnet_pallas(dosage, x, params, cfg_density, num_grid, cfg, isenhance,
                 tile_b=1024, mm_dtype=jnp.bfloat16):
    batch, in_dim = x.shape
    nq = len(cfg)
    outdim = cfg[-1][1]
    last_vpu = (outdim == 1)
    fuse_l0 = not (last_vpu and nq == 1)

    in_pad = _round_up(in_dim + 1, LANE)           # lane 0 carries the dose
    hid_pad = _round_up(cfg_density[-1][1], LANE)
    grid_pad = _round_up(num_grid + 1, LANE)
    out_width = _round_up(outdim + 1, LANE)        # Q lanes + one lane for g

    # tile size: multiple of 8; keep >=2 grid steps when the batch allows it
    tb = min(int(tile_b), _round_up(max(batch, 8), 8))
    if batch >= 16:
        tb = min(tb, _round_up(-(-batch // 2), 8))
    tb = max(8, _round_up(tb, 8))

    # ------------------------------------------------------------------
    # Host-side head grouping (this wrapper is not jitted): bucket rows by
    # treatment interval, pad each bucket to a multiple of tb, build a
    # per-tile head table for the scalar-prefetch index_maps.
    # ------------------------------------------------------------------
    d_np = np.asarray(dosage, dtype=np.float32)
    head_np = np.zeros((batch,), np.int32)
    for h in range(N_HEADS):
        head_np[(d_np >= PT[h]) & (d_np < PT[h + 1])] = h
    # torch semantics: a row with t outside [0,1) matches no head -> Q row = 0
    valid_np = (d_np >= PT[0]) & (d_np < PT[N_HEADS])

    perm_chunks, tile_heads = [], []
    slot_of = np.zeros((batch,), np.int32)
    offset = 0
    for h in range(N_HEADS):
        grp = np.nonzero(head_np == h)[0].astype(np.int32)
        if grp.size == 0:
            continue
        n_tiles = -(-int(grp.size) // tb)
        slots = n_tiles * tb
        chunk = np.full((slots,), grp[0], np.int32)  # pad slots with a real row
        chunk[:grp.size] = grp
        slot_of[grp] = offset + np.arange(grp.size, dtype=np.int32)
        perm_chunks.append(chunk)
        tile_heads.extend([h] * n_tiles)
        offset += slots
    perm = np.concatenate(perm_chunks)
    num_tiles = len(tile_heads)
    total = num_tiles * tb
    tile_heads = jnp.asarray(np.asarray(tile_heads, np.int32))
    perm_j = jnp.asarray(perm)
    slot_j = jnp.asarray(slot_of)

    # gathered inputs, dose folded into lane 0 of the feature block
    xs = x.astype(jnp.float32)[perm_j]
    ds = dosage.astype(jnp.float32)[perm_j]
    xp = jnp.zeros((total, in_pad), jnp.float32)
    xp = xp.at[:, 0].set(ds).at[:, 1:1 + in_dim].set(xs)

    # ------------------------------------------------------------------
    # Pack parameters (zero-pad to lane multiples; bf16 for MXU operands).
    # ------------------------------------------------------------------
    def pad2(W, rp, cp, row_off=0):
        return jnp.zeros((rp, cp), jnp.float32).at[
            row_off:row_off + W.shape[0], :W.shape[1]].set(W)

    def pad_row(b, cp):
        return jnp.zeros((1, cp), jnp.float32).at[0, :b.shape[0]].set(b)

    def pad3(W, rp, cp):
        return jnp.zeros((N_HEADS, rp, cp), jnp.float32).at[
            :, :W.shape[1], :W.shape[2]].set(W)

    def pad3_row(b, cp):
        return jnp.zeros((N_HEADS, 1, cp), jnp.float32).at[
            :, :, :b.shape[2]].set(b)

    kernel_inputs = [xp]
    in_specs = [pl.BlockSpec((tb, in_pad), lambda i, th: (i, 0))]

    def const_spec(arr):
        n = arr.ndim
        in_specs.append(pl.BlockSpec(arr.shape, lambda i, th, _n=n: (0,) * _n))
        kernel_inputs.append(arr)

    def head_spec(arr):
        in_specs.append(pl.BlockSpec((1,) + arr.shape[1:],
                                     lambda i, th: (th[i], 0, 0)))
        kernel_inputs.append(arr)

    # hidden_features layers (constant-index, VMEM-resident)
    d_layers = []
    for li, (ind, outd, isbias, act) in enumerate(cfg_density):
        ip = in_pad if li == 0 else _round_up(ind, LANE)
        op = _round_up(outd, LANE)
        W, b = params["density"][li]
        const_spec(pad2(W, ip, op, row_off=(1 if li == 0 else 0)).astype(mm_dtype))
        if isbias:
            const_spec(pad_row(b, op))
        d_layers.append((act, bool(isbias)))

    # padded q-layer widths (last layer width includes the extra g lane)
    q_in = [_round_up(c[0], LANE) for c in cfg]
    q_out = [(_round_up(c[1], LANE) if l < nq - 1 else out_width)
             for l, c in enumerate(cfg)]

    # density estimator head (+ fused first Treat_Linear weight per head)
    Wd, bd = params["dhead"]
    Wd_p = pad2(Wd, hid_pad, grid_pad)
    bd_p = jnp.full((1, grid_pad), NEG_BIG, jnp.float32).at[
        0, :num_grid + 1].set(bd)
    if fuse_l0:
        W0 = params["q"][0][0]
        W0_p = pad3(W0, q_in[0], q_out[0])
        Wbig = jnp.concatenate(
            [jnp.broadcast_to(Wd_p[None], (N_HEADS,) + Wd_p.shape), W0_p],
            axis=2).astype(mm_dtype)
        head_spec(Wbig)
    else:
        const_spec(Wd_p.astype(mm_dtype))
    const_spec(bd_p)

    # multi-head Treat_Linear stacks (only the active head slice is DMA'd)
    q_layers = []
    for l, (ind, outd, isbias, act) in enumerate(cfg):
        istreat = 1 if (l == 0 or isenhance) else 0
        W, tw, b = params["q"][l]
        is_last = (l == nq - 1)
        if l == 0 and fuse_l0:
            pass                                      # weight fused into Wbig
        elif is_last and last_vpu:
            head_spec(pad3(jnp.transpose(W, (0, 2, 1)), 1, q_in[l]))  # f32 row
        else:
            head_spec(pad3(W, q_in[l], q_out[l]).astype(mm_dtype))
        if istreat:
            head_spec(pad3_row(tw, q_out[l]))
        if isbias:
            head_spec(pad3_row(b, q_out[l]))
        q_layers.append((act, bool(istreat), bool(isbias)))

    kernel = _make_drnet_kernel(tuple(d_layers), tuple(q_layers), num_grid,
                                grid_pad, outdim, last_vpu, fuse_l0, mm_dtype)

    out = pl.pallas_call(
        kernel,
        out_shape=jax.ShapeDtypeStruct((total, out_width), jnp.float32),
        grid_spec=pltpu.PrefetchScalarGridSpec(
            num_scalar_prefetch=1,
            grid=(num_tiles,),
            in_specs=in_specs,
            out_specs=pl.BlockSpec((tb, out_width), lambda i, th: (i, 0))),
        compiler_params=pltpu.CompilerParams(
            dimension_semantics=("parallel",)),
    )(tile_heads, *kernel_inputs)

    packed_rows = out[slot_j]              # un-sort back to input order
    Q = packed_rows[:, :outdim]
    g = packed_rows[:, outdim]
    Q = jnp.where(jnp.asarray(valid_np)[:, None], Q, 0.0)
    return g, Q


# ----------------------------------------------------------------------------
# Pure-JAX reference (mirrors the torch forward).
# mm_dtype=bfloat16 mirrors the kernel's MXU operand precision;
# mm_dtype=float32 is the plain f32 module semantics.
# ----------------------------------------------------------------------------
def drnet_ref(dosage, x, params, cfg_density, num_grid, cfg, isenhance,
              mm_dtype=jnp.float32):
    def mm(a, b):
        return jnp.dot(a.astype(mm_dtype), b.astype(mm_dtype),
                       preferred_element_type=jnp.float32)

    t = dosage.astype(jnp.float32)
    feat = x.astype(jnp.float32)
    for (W, b), lc in zip(params["density"], cfg_density):
        o = mm(feat, W)
        if b is not None:
            o = o + b
        feat = _act(o, lc[3])
    hidden = feat

    Wd, bd = params["dhead"]
    sm = jax.nn.softmax(mm(hidden, Wd) + bd, axis=1)
    tg = t * num_grid
    U = jnp.ceil(tg)
    inter = 1.0 - (U - tg)
    L = U - 1.0
    L = jnp.where(L < 0.0, L + 1.0, L)
    ridx = jnp.arange(x.shape[0])
    L_out = sm[ridx, L.astype(jnp.int32)]
    U_out = sm[ridx, U.astype(jnp.int32)]
    g = L_out + (U_out - L_out) * inter

    nq = len(cfg)
    outdim = cfg[-1][1]
    Q = jnp.zeros((x.shape[0], outdim), jnp.float32)
    for h in range(N_HEADS):
        hf = hidden
        for l, (W, tw, b) in enumerate(params["q"]):
            if l == nq - 1 and outdim == 1:
                # kernel runs the outdim==1 last layer on the VPU in f32
                o = jnp.dot(hf, W[h], preferred_element_type=jnp.float32)
            else:
                o = mm(hf, W[h])
            if tw is not None:
                o = o + t[:, None] * tw[h]
            if b is not None:
                o = o + b[h]
            hf = _act(o, cfg[l][3])
        mask = (t >= PT[h]) & (t < PT[h + 1])
        Q = jnp.where(mask[:, None], hf, Q)
    return g, Q


# ----------------------------------------------------------------------------
# Parameter construction
# ----------------------------------------------------------------------------
def init_params(key, cfg_density, num_grid, cfg, isenhance):
    keys = iter(jax.random.split(key, 64))
    params = {"density": [], "dhead": None, "q": []}
    for (ind, outd, isbias, act) in cfg_density:
        W = jax.random.normal(next(keys), (ind, outd), jnp.float32) * 0.1
        b = (jax.random.normal(next(keys), (outd,), jnp.float32) * 0.1
             if isbias else None)
        params["density"].append((W, b))
    dh = cfg_density[-1][1]
    Wd = jax.random.normal(next(keys), (dh, num_grid + 1), jnp.float32) * 0.1
    bd = jax.random.normal(next(keys), (num_grid + 1,), jnp.float32) * 0.1
    params["dhead"] = (Wd, bd)
    for l, (ind, outd, isbias, act) in enumerate(cfg):
        istreat = (l == 0) or bool(isenhance)
        W = jax.random.normal(next(keys), (N_HEADS, ind, outd), jnp.float32) * 0.1
        tw = (jax.random.normal(next(keys), (N_HEADS, 1, outd), jnp.float32) * 0.1
              if istreat else None)
        b = (jax.random.normal(next(keys), (N_HEADS, 1, outd), jnp.float32) * 0.1
             if isbias else None)
        params["q"].append((W, tw, b))
    return params


if __name__ == "__main__":
    # Small, Drnet-typical config.
    cfg_density = [(25, 50, 1, "relu"), (50, 50, 1, "relu")]
    num_grid = 10
    cfg = [(50, 50, 1, "relu"), (50, 1, 1, "id")]
    isenhance = 1
    batch, in_dim = 64, 25

    key = jax.random.PRNGKey(0)
    k1, k2, k3 = jax.random.split(key, 3)
    x = jax.random.normal(k1, (batch, in_dim), jnp.float32)
    dosage = jax.random.uniform(k2, (batch,), jnp.float32)
    params = init_params(k3, cfg_density, num_grid, cfg, isenhance)

    g, Q = drnet_pallas(dosage, x, params, cfg_density, num_grid, cfg,
                        isenhance, tile_b=1024)
    jax.block_until_ready((g, Q))

    # tight check: reference that mirrors the kernel's bf16 MXU operands
    g_r, Q_r = drnet_ref(dosage, x, params, cfg_density, num_grid, cfg,
                         isenhance, mm_dtype=jnp.bfloat16)
    # loose check: pure-f32 module semantics
    g_f, Q_f = drnet_ref(dosage, x, params, cfg_density, num_grid, cfg,
                         isenhance, mm_dtype=jnp.float32)
    jax.block_until_ready((g_r, Q_r, g_f, Q_f))

    tight_g = float(jnp.max(jnp.abs(g - g_r)))
    tight_q = float(jnp.max(jnp.abs(Q - Q_r)))
    loose_g = float(jnp.max(jnp.abs(g - g_f)))
    loose_q = float(jnp.max(jnp.abs(Q - Q_f)))
    if tight_g > 2e-3 or tight_q > 2e-3:
        raise AssertionError(f"bf16-ref mismatch: g {tight_g}, Q {tight_q}")
    if loose_g > 2e-2 or loose_q > 2e-2:
        raise AssertionError(f"f32-ref mismatch: g {loose_g}, Q {loose_q}")
    print("KERNEL_OK")
</pallas_src>

<mosaic_0001>
module attributes {stable_mosaic.version = 11 : i64} {
  func.func @kernel(%arg0: i32, %arg1: memref<5xi32, #tpu.memory_space<smem>>, %arg2: memref<32x128xf32, #tpu.memory_space<vmem>>, %arg3: memref<128x128xbf16, #tpu.memory_space<vmem>>, %arg4: memref<1x128xf32, #tpu.memory_space<vmem>>, %arg5: memref<128x128xbf16, #tpu.memory_space<vmem>>, %arg6: memref<1x128xf32, #tpu.memory_space<vmem>>, %arg7: memref<1x128x256xbf16, #tpu.memory_space<vmem>>, %arg8: memref<1x128xf32, #tpu.memory_space<vmem>>, %arg9: memref<1x1x128xf32, #tpu.memory_space<vmem>>, %arg10: memref<1x1x128xf32, #tpu.memory_space<vmem>>, %arg11: memref<1x1x128xf32, #tpu.memory_space<vmem>>, %arg12: memref<1x1x128xf32, #tpu.memory_space<vmem>>, %arg13: memref<1x1x128xf32, #tpu.memory_space<vmem>>, %arg14: memref<32x128xf32, #tpu.memory_space<vmem>>) attributes {dimension_semantics = [#tpu.dimension_semantics<parallel>], iteration_bounds = array<i64: 5>, scalar_prefetch = 1 : i64, scratch_operands = 0 : i64, tpu.core_type = #tpu.core_type<tc>, window_params = [{transform_indices = @transform_0, window_bounds = array<i64: 32, 128>}, {pipeline_mode = #tpu.pipeline_mode<synchronous>, transform_indices = @transform_1, window_bounds = array<i64: 128, 128>}, {pipeline_mode = #tpu.pipeline_mode<synchronous>, transform_indices = @transform_2, window_bounds = array<i64: 1, 128>}, {pipeline_mode = #tpu.pipeline_mode<synchronous>, transform_indices = @transform_3, window_bounds = array<i64: 128, 128>}, {pipeline_mode = #tpu.pipeline_mode<synchronous>, transform_indices = @transform_4, window_bounds = array<i64: 1, 128>}, {transform_indices = @transform_5, window_bounds = array<i64: 1, 128, 256>}, {pipeline_mode = #tpu.pipeline_mode<synchronous>, transform_indices = @transform_6, window_bounds = array<i64: 1, 128>}, {transform_indices = @transform_7, window_bounds = array<i64: 1, 1, 128>}, {transform_indices = @transform_8, window_bounds = array<i64: 1, 1, 128>}, {transform_indices = @transform_9, window_bounds = array<i64: 1, 1, 128>}, {transform_indices = @transform_10, window_bounds = array<i64: 1, 1, 128>}, {transform_indices = @transform_11, window_bounds = array<i64: 1, 1, 128>}, {transform_indices = @transform_12, window_bounds = array<i64: 32, 128>}]} {
    %c0 = arith.constant 0 : index
    %c0_0 = arith.constant 0 : index
    %0 = vector.load %arg2[%c0, %c0_0] : memref<32x128xf32, #tpu.memory_space<vmem>>, vector<32x128xf32>
    %1 = vector.extract_strided_slice %0 {offsets = [0, 0], sizes = [32, 1], strides = [1, 1]} : vector<32x128xf32> to vector<32x1xf32>
    %c0_1 = arith.constant 0 : index
    %c0_2 = arith.constant 0 : index
    %2 = vector.load %arg3[%c0_1, %c0_2] : memref<128x128xbf16, #tpu.memory_space<vmem>>, vector<128x128xbf16>
    %3 = arith.truncf %0 : vector<32x128xf32> to vector<32x128xbf16>
    %cst = arith.constant dense<0.000000e+00> : vector<32x128xf32>
    %4 = tpu.matmul %3, %2, %cst {dimension_numbers = #tpu.dot_dimension_numbers<[1], [0], [0], [1], [0, 0, 1, 1], [], []>} : vector<32x128xbf16>, vector<128x128xbf16>, vector<32x128xf32> -> vector<32x128xf32>
    %c0_3 = arith.constant 0 : index
    %c0_4 = arith.constant 0 : index
    %5 = vector.load %arg4[%c0_3, %c0_4] : memref<1x128xf32, #tpu.memory_space<vmem>>, vector<1x128xf32>
    %6 = vector.broadcast %5 : vector<1x128xf32> to vector<32x128xf32>
    %7 = arith.addf %4, %6 : vector<32x128xf32>
    %cst_5 = arith.constant 0.000000e+00 : f32
    %8 = vector.broadcast %cst_5 : f32 to vector<32x128xf32>
    %9 = arith.maximumf %7, %8 : vector<32x128xf32>
    %c0_6 = arith.constant 0 : index
    %c0_7 = arith.constant 0 : index
    %10 = vector.load %arg5[%c0_6, %c0_7] : memref<128x128xbf16, #tpu.memory_space<vmem>>, vector<128x128xbf16>
    %11 = arith.truncf %9 : vector<32x128xf32> to vector<32x128xbf16>
    %cst_8 = arith.constant dense<0.000000e+00> : vector<32x128xf32>
    %12 = tpu.matmul %11, %10, %cst_8 {dimension_numbers = #tpu.dot_dimension_numbers<[1], [0], [0], [1], [0, 0, 1, 1], [], []>} : vector<32x128xbf16>, vector<128x128xbf16>, vector<32x128xf32> -> vector<32x128xf32>
    %c0_9 = arith.constant 0 : index
    %c0_10 = arith.constant 0 : index
    %13 = vector.load %arg6[%c0_9, %c0_10] : memref<1x128xf32, #tpu.memory_space<vmem>>, vector<1x128xf32>
    %14 = vector.broadcast %13 : vector<1x128xf32> to vector<32x128xf32>
    %15 = arith.addf %12, %14 : vector<32x128xf32>
    %cst_11 = arith.constant 0.000000e+00 : f32
    %16 = vector.broadcast %cst_11 : f32 to vector<32x128xf32>
    %17 = arith.maximumf %15, %16 : vector<32x128xf32>
    %18 = arith.truncf %17 : vector<32x128xf32> to vector<32x128xbf16>
    %c0_12 = arith.constant 0 : index
    %c0_13 = arith.constant 0 : index
    %c0_14 = arith.constant 0 : index
    %19 = vector.load %arg7[%c0_12, %c0_13, %c0_14] : memref<1x128x256xbf16, #tpu.memory_space<vmem>>, vector<1x128x256xbf16>
    %20 = vector.shape_cast %19 : vector<1x128x256xbf16> to vector<128x256xbf16>
    %cst_15 = arith.constant dense<0.000000e+00> : vector<32x256xf32>
    %21 = tpu.matmul %18, %20, %cst_15 {dimension_numbers = #tpu.dot_dimension_numbers<[1], [0], [0], [1], [0, 0, 1, 1], [], []>} : vector<32x128xbf16>, vector<128x256xbf16>, vector<32x256xf32> -> vector<32x256xf32>
    %22 = vector.extract_strided_slice %21 {offsets = [0, 0], sizes = [32, 128], strides = [1, 1]} : vector<32x256xf32> to vector<32x128xf32>
    %23 = vector.extract_strided_slice %21 {offsets = [0, 128], sizes = [32, 128], strides = [1, 1]} : vector<32x256xf32> to vector<32x128xf32>
    %c0_16 = arith.constant 0 : index
    %c0_17 = arith.constant 0 : index
    %24 = vector.load %arg8[%c0_16, %c0_17] : memref<1x128xf32, #tpu.memory_space<vmem>>, vector<1x128xf32>
    %25 = vector.broadcast %24 : vector<1x128xf32> to vector<32x128xf32>
    %26 = arith.addf %22, %25 : vector<32x128xf32>
    %cst_18 = arith.constant dense<0xFF800000> : vector<32xf32>
    %27 = vector.multi_reduction <maximumf>, %26, %cst_18 [1] : vector<32x128xf32> to vector<32xf32>
    %28 = vector.shape_cast %27 : vector<32xf32> to vector<32x1xf32>
    %29 = vector.broadcast %28 : vector<32x1xf32> to vector<32x128xf32>
    %30 = arith.subf %26, %29 : vector<32x128xf32>
    %31 = math.exp %30 : vector<32x128xf32>
    %cst_19 = arith.constant dense<0.000000e+00> : vector<32xf32>
    %32 = vector.multi_reduction <add>, %31, %cst_19 [1] : vector<32x128xf32> to vector<32xf32>
    %33 = vector.shape_cast %32 : vector<32xf32> to vector<32x1xf32>
    %cst_20 = arith.constant 1.000000e+01 : f32
    %34 = vector.broadcast %cst_20 : f32 to vector<32x1xf32>
    %35 = arith.mulf %1, %34 : vector<32x1xf32>
    %36 = math.ceil %35 : vector<32x1xf32>
    %37 = arith.subf %36, %35 : vector<32x1xf32>
    %cst_21 = arith.constant 1.000000e+00 : f32
    %38 = vector.broadcast %cst_21 : f32 to vector<32x1xf32>
    %39 = arith.subf %38, %37 : vector<32x1xf32>
    %cst_22 = arith.constant 1.000000e+00 : f32
    %40 = vector.broadcast %cst_22 : f32 to vector<32x1xf32>
    %41 = arith.subf %36, %40 : vector<32x1xf32>
    %cst_23 = arith.constant 0.000000e+00 : f32
    %42 = vector.broadcast %cst_23 : f32 to vector<32x1xf32>
    %43 = arith.cmpf olt, %41, %42 : vector<32x1xf32>
    %cst_24 = arith.constant 1.000000e+00 : f32
    %44 = vector.broadcast %cst_24 : f32 to vector<32x1xf32>
    %45 = arith.addf %41, %44 : vector<32x1xf32>
    %46 = arith.select %43, %45, %41 : vector<32x1xi1>, vector<32x1xf32>
    %47 = tpu.iota {dimensions = array<i32: 1>} : vector<32x128xi32>
    %48 = arith.fptosi %46 : vector<32x1xf32> to vector<32x1xi32>
    %49 = arith.fptosi %36 : vector<32x1xf32> to vector<32x1xi32>
    %50 = vector.broadcast %48 : vector<32x1xi32> to vector<32x128xi32>
    %51 = arith.cmpi eq, %47, %50 : vector<32x128xi32>
    %cst_25 = arith.constant 1.000000e+00 : f32
    %52 = vector.broadcast %cst_25 : f32 to vector<32x1xf32>
    %53 = arith.subf %52, %39 : vector<32x1xf32>
    %cst_26 = arith.constant 0.000000e+00 : f32
    %54 = vector.shape_cast %53 : vector<32x1xf32> to vector<32x1xf32>
    %55 = vector.broadcast %54 : vector<32x1xf32> to vector<32x128xf32>
    %56 = vector.broadcast %cst_26 : f32 to vector<32x128xf32>
    %57 = arith.select %51, %55, %56 : vector<32x128xi1>, vector<32x128xf32>
    %58 = vector.broadcast %49 : vector<32x1xi32> to vector<32x128xi32>
    %59 = arith.cmpi eq, %47, %58 : vector<32x128xi32>
    %cst_27 = arith.constant 0.000000e+00 : f32
    %60 = vector.shape_cast %39 : vector<32x1xf32> to vector<32x1xf32>
    %61 = vector.broadcast %60 : vector<32x1xf32> to vector<32x128xf32>
    %62 = vector.broadcast %cst_27 : f32 to vector<32x128xf32>
    %63 = arith.select %59, %61, %62 : vector<32x128xi1>, vector<32x128xf32>
    %64 = arith.addf %57, %63 : vector<32x128xf32>
    %65 = arith.mulf %31, %64 : vector<32x128xf32>
    %cst_28 = arith.constant dense<0.000000e+00> : vector<32xf32>
    %66 = vector.multi_reduction <add>, %65, %cst_28 [1] : vector<32x128xf32> to vector<32xf32>
    %67 = vector.shape_cast %66 : vector<32xf32> to vector<32x1xf32>
    %68 = arith.divf %67, %33 : vector<32x1xf32>
    %c0_29 = arith.constant 0 : index
    %c0_30 = arith.constant 0 : index
    %c0_31 = arith.constant 0 : index
    %69 = vector.load %arg9[%c0_29, %c0_30, %c0_31] : memref<1x1x128xf32, #tpu.memory_space<vmem>>, vector<1x1x128xf32>
    %70 = vector.shape_cast %69 : vector<1x1x128xf32> to vector<1x128xf32>
    %71 = vector.broadcast %1 : vector<32x1xf32> to vector<32x128xf32>
    %72 = vector.broadcast %70 : vector<1x128xf32> to vector<32x128xf32>
    %73 = arith.mulf %71, %72 : vector<32x128xf32>
    %74 = arith.addf %23, %73 : vector<32x128xf32>
    %c0_32 = arith.constant 0 : index
    %c0_33 = arith.constant 0 : index
    %c0_34 = arith.constant 0 : index
    %75 = vector.load %arg10[%c0_32, %c0_33, %c0_34] : memref<1x1x128xf32, #tpu.memory_space<vmem>>, vector<1x1x128xf32>
    %76 = vector.shape_cast %75 : vector<1x1x128xf32> to vector<1x128xf32>
    %77 = vector.broadcast %76 : vector<1x128xf32> to vector<32x128xf32>
    %78 = arith.addf %74, %77 : vector<32x128xf32>
    %cst_35 = arith.constant 0.000000e+00 : f32
    %79 = vector.broadcast %cst_35 : f32 to vector<32x128xf32>
    %80 = arith.maximumf %78, %79 : vector<32x128xf32>
    %c0_36 = arith.constant 0 : index
    %c0_37 = arith.constant 0 : index
    %c0_38 = arith.constant 0 : index
    %81 = vector.load %arg11[%c0_36, %c0_37, %c0_38] : memref<1x1x128xf32, #tpu.memory_space<vmem>>, vector<1x1x128xf32>
    %82 = vector.shape_cast %81 : vector<1x1x128xf32> to vector<1x128xf32>
    %83 = vector.broadcast %82 : vector<1x128xf32> to vector<32x128xf32>
    %84 = arith.mulf %80, %83 : vector<32x128xf32>
    %cst_39 = arith.constant dense<0.000000e+00> : vector<32xf32>
    %85 = vector.multi_reduction <add>, %84, %cst_39 [1] : vector<32x128xf32> to vector<32xf32>
    %86 = vector.shape_cast %85 : vector<32xf32> to vector<32x1xf32>
    %c0_40 = arith.constant 0 : index
    %c0_41 = arith.constant 0 : index
    %c0_42 = arith.constant 0 : index
    %87 = vector.load %arg12[%c0_40, %c0_41, %c0_42] : memref<1x1x128xf32, #tpu.memory_space<vmem>>, vector<1x1x128xf32>
    %88 = vector.shape_cast %87 : vector<1x1x128xf32> to vector<1x128xf32>
    %89 = vector.extract_strided_slice %88 {offsets = [0, 0], sizes = [1, 1], strides = [1, 1]} : vector<1x128xf32> to vector<1x1xf32>
    %90 = vector.broadcast %89 : vector<1x1xf32> to vector<32x1xf32>
    %91 = arith.mulf %1, %90 : vector<32x1xf32>
    %92 = arith.addf %86, %91 : vector<32x1xf32>
    %c0_43 = arith.constant 0 : index
    %c0_44 = arith.constant 0 : index
    %c0_45 = arith.constant 0 : index
    %93 = vector.load %arg13[%c0_43, %c0_44, %c0_45] : memref<1x1x128xf32, #tpu.memory_space<vmem>>, vector<1x1x128xf32>
    %94 = vector.shape_cast %93 : vector<1x1x128xf32> to vector<1x128xf32>
    %95 = vector.extract_strided_slice %94 {offsets = [0, 0], sizes = [1, 1], strides = [1, 1]} : vector<1x128xf32> to vector<1x1xf32>
    %96 = vector.broadcast %95 : vector<1x1xf32> to vector<32x1xf32>
    %97 = arith.addf %92, %96 : vector<32x1xf32>
    %98 = tpu.iota {dimensions = array<i32: 1>} : vector<32x128xi32>
    %c0_i32 = arith.constant 0 : i32
    %99 = vector.broadcast %c0_i32 : i32 to vector<32x128xi32>
    %100 = arith.cmpi eq, %98, %99 : vector<32x128xi32>
    %cst_46 = arith.constant 0.000000e+00 : f32
    %101 = vector.shape_cast %97 : vector<32x1xf32> to vector<32x1xf32>
    %102 = vector.broadcast %101 : vector<32x1xf32> to vector<32x128xf32>
    %103 = vector.broadcast %cst_46 : f32 to vector<32x128xf32>
    %104 = arith.select %100, %102, %103 : vector<32x128xi1>, vector<32x128xf32>
    %c1_i32 = arith.constant 1 : i32
    %105 = vector.broadcast %c1_i32 : i32 to vector<32x128xi32>
    %106 = arith.cmpi eq, %98, %105 : vector<32x128xi32>
    %107 = vector.shape_cast %68 : vector<32x1xf32> to vector<32x1xf32>
    %108 = vector.broadcast %107 : vector<32x1xf32> to vector<32x128xf32>
    %109 = arith.select %106, %108, %104 : vector<32x128xi1>, vector<32x128xf32>
    %c0_47 = arith.constant 0 : index
    %c0_48 = arith.constant 0 : index
    %110 = vector.load %arg14[%c0_47, %c0_48] : memref<32x128xf32, #tpu.memory_space<vmem>>, vector<32x128xf32>
    tpu.vector_store %arg14[%c0_47, %c0_48], %109 {strides = array<i32>} : memref<32x128xf32, #tpu.memory_space<vmem>>, vector<32x128xf32>,
    return
  }
  func.func @transform_0(%arg0: i32, %arg1: memref<5xi32, #tpu.memory_space<smem>>) -> (i32, i32) {
    %c0_i32 = arith.constant 0 : i32
    %c0_i32_0 = arith.constant 0 : i32
    return %arg0, %c0_i32 : i32, i32
  }
  func.func @transform_1(%arg0: i32, %arg1: memref<5xi32, #tpu.memory_space<smem>>) -> (i32, i32) {
    %c0_i32 = arith.constant 0 : i32
    %c0_i32_0 = arith.constant 0 : i32
    %c0_i32_1 = arith.constant 0 : i32
    return %c0_i32, %c0_i32_0 : i32, i32
  }
  func.func @transform_2(%arg0: i32, %arg1: memref<5xi32, #tpu.memory_space<smem>>) -> (i32, i32) {
    %c0_i32 = arith.constant 0 : i32
    %c0_i32_0 = arith.constant 0 : i32
    %c0_i32_1 = arith.constant 0 : i32
    return %c0_i32, %c0_i32_0 : i32, i32
  }
  func.func @transform_3(%arg0: i32, %arg1: memref<5xi32, #tpu.memory_space<smem>>) -> (i32, i32) {
    %c0_i32 = arith.constant 0 : i32
    %c0_i32_0 = arith.constant 0 : i32
    %c0_i32_1 = arith.constant 0 : i32
    return %c0_i32, %c0_i32_0 : i32, i32
  }
  func.func @transform_4(%arg0: i32, %arg1: memref<5xi32, #tpu.memory_space<smem>>) -> (i32, i32) {
    %c0_i32 = arith.constant 0 : i32
    %c0_i32_0 = arith.constant 0 : i32
    %c0_i32_1 = arith.constant 0 : i32
    return %c0_i32, %c0_i32_0 : i32, i32
  }
  func.func @transform_5(%arg0: i32, %arg1: memref<5xi32, #tpu.memory_space<smem>>) -> (i32, i32, i32) {
    %0 = arith.index_cast %arg0 : i32 to index
    %1 = memref.load %arg1[%0] : memref<5xi32, #tpu.memory_space<smem>>
    %c0_i32 = arith.constant 0 : i32
    %c0_i32_0 = arith.constant 0 : i32
    %c0_i32_1 = arith.constant 0 : i32
    return %1, %c0_i32, %c0_i32_0 : i32, i32, i32
  }
  func.func @transform_6(%arg0: i32, %arg1: memref<5xi32, #tpu.memory_space<smem>>) -> (i32, i32) {
    %c0_i32 = arith.constant 0 : i32
    %c0_i32_0 = arith.constant 0 : i32
    %c0_i32_1 = arith.constant 0 : i32
    return %c0_i32, %c0_i32_0 : i32, i32
  }
  func.func @transform_7(%arg0: i32, %arg1: memref<5xi32, #tpu.memory_space<smem>>) -> (i32, i32, i32) {
    %0 = arith.index_cast %arg0 : i32 to index
    %1 = memref.load %arg1[%0] : memref<5xi32, #tpu.memory_space<smem>>
    %c0_i32 = arith.constant 0 : i32
    %c0_i32_0 = arith.constant 0 : i32
    %c0_i32_1 = arith.constant 0 : i32
    return %1, %c0_i32, %c0_i32_0 : i32, i32, i32
  }
  func.func @transform_8(%arg0: i32, %arg1: memref<5xi32, #tpu.memory_space<smem>>) -> (i32, i32, i32) {
    %0 = arith.index_cast %arg0 : i32 to index
    %1 = memref.load %arg1[%0] : memref<5xi32, #tpu.memory_space<smem>>
    %c0_i32 = arith.constant 0 : i32
    %c0_i32_0 = arith.constant 0 : i32
    %c0_i32_1 = arith.constant 0 : i32
    return %1, %c0_i32, %c0_i32_0 : i32, i32, i32
  }
  func.func @transform_9(%arg0: i32, %arg1: memref<5xi32, #tpu.memory_space<smem>>) -> (i32, i32, i32) {
    %0 = arith.index_cast %arg0 : i32 to index
    %1 = memref.load %arg1[%0] : memref<5xi32, #tpu.memory_space<smem>>
    %c0_i32 = arith.constant 0 : i32
    %c0_i32_0 = arith.constant 0 : i32
    %c0_i32_1 = arith.constant 0 : i32
    return %1, %c0_i32, %c0_i32_0 : i32, i32, i32
  }
  func.func @transform_10(%arg0: i32, %arg1: memref<5xi32, #tpu.memory_space<smem>>) -> (i32, i32, i32) {
    %0 = arith.index_cast %arg0 : i32 to index
    %1 = memref.load %arg1[%0] : memref<5xi32, #tpu.memory_space<smem>>
    %c0_i32 = arith.constant 0 : i32
    %c0_i32_0 = arith.constant 0 : i32
    %c0_i32_1 = arith.constant 0 : i32
    return %1, %c0_i32, %c0_i32_0 : i32, i32, i32
  }
  func.func @transform_11(%arg0: i32, %arg1: memref<5xi32, #tpu.memory_space<smem>>) -> (i32, i32, i32) {
    %0 = arith.index_cast %arg0 : i32 to index
    %1 = memref.load %arg1[%0] : memref<5xi32, #tpu.memory_space<smem>>
    %c0_i32 = arith.constant 0 : i32
    %c0_i32_0 = arith.constant 0 : i32
    %c0_i32_1 = arith.constant 0 : i32
    return %1, %c0_i32, %c0_i32_0 : i32, i32, i32
  }
  func.func @transform_12(%arg0: i32, %arg1: memref<5xi32, #tpu.memory_space<smem>>) -> (i32, i32) {
    %c0_i32 = arith.constant 0 : i32
    %c0_i32_0 = arith.constant 0 : i32
    return %arg0, %c0_i32 : i32, i32
  }
}

</mosaic_0001>

<llo_original>
// kernel: tpu_custom_call.1
$region0: #{tpu_custom_call.1}
  #allocation0 [shape = 'u32[]', space=smem, size = 0x4, offset = 0x4, fixed_abs, tag = 'smem constant byte address 0x4 - core index']
  #allocation1 [shape = 'u32[72,128]{1,0:T(1,128)}', space=vmem, size = 0x9000, scoped, tag = 'internal scratch']
  #allocation2 [shape = 's32[1]{0}', space=sflag, size = 0x4, scoped, tag = 'scoped memory for tpu_custom_call.1']
  #allocation3 [shape = 'u8[512]{0}', space=smem, size = 0x200, scoped, tag = 'prefetched SMEM operand 0']
  %s0 = inlined_call_operand.hbm [shape: s32[5], index: 0, kind: input, shape index: {}]
  %s1 = inlined_call_operand.hbm [shape: f32[160,128], index: 1, kind: input, shape index: {}]
  %s2 = inlined_call_operand.hbm [shape: bf16[128,128], index: 2, kind: input, shape index: {}]
  %s3 = inlined_call_operand.hbm [shape: f32[1,128], index: 3, kind: input, shape index: {}]
  %s4 = inlined_call_operand.hbm [shape: bf16[128,128], index: 4, kind: input, shape index: {}]
  %s5 = inlined_call_operand.hbm [shape: f32[1,128], index: 5, kind: input, shape index: {}]
  %s6 = inlined_call_operand.hbm [shape: bf16[5,128,256], index: 6, kind: input, shape index: {}]
  %s7 = inlined_call_operand.hbm [shape: f32[1,128], index: 7, kind: input, shape index: {}]
  %s8 = inlined_call_operand.vmem [shape: f32[5,1,128], index: 8, kind: input, shape index: {}]
  %s9 = inlined_call_operand.hbm [shape: f32[5,1,128], index: 9, kind: input, shape index: {}]
  %s10 = inlined_call_operand.hbm [shape: f32[5,1,128], index: 10, kind: input, shape index: {}]
  %s11 = inlined_call_operand.vmem [shape: f32[5,1,128], index: 11, kind: input, shape index: {}]
  %s12 = inlined_call_operand.hbm [shape: f32[5,1,128], index: 12, kind: input, shape index: {}]
  %s13 = inlined_call_operand.hbm [shape: f32[160,128], index: 13, kind: output, shape index: {}]
  %s14 = sld [smem:[#allocation0]]
  $region121: #{tpu_custom_call.1} parent=0
    _
  %s16 = ssub.s32 1, %s14
  %s17 = scalar_select 0, %s16, %s14
  %s19 = sshll.u32 %s0, 4
  %s20 = int_to_ptr.hbm [resolvable:$true] %s19
  %22 = dma.hbm_to_smem %s20, 16, [#allocation3], [#allocation2]
  %24 = dma.done [#allocation2], 16
  %25 = sfence
  $region1: #{tpu_custom_call.1} parent=0
    #allocation4 [shape = 'u8[32768]{0}', space=vmem, size = 0x8000, scoped, tag = 'input window, operand 1']
    #allocation5 [shape = 's32[2]{0}', space=sflag, size = 0x8, scoped, tag = 'scoped memory for tpu_custom_call.1']
    #allocation6 [shape = 's32[2]{0}', space=sflag, size = 0x8, scoped, tag = 'scoped memory for tpu_custom_call.1']
    #allocation7 [shape = 'u8[32768]{0}', space=vmem, size = 0x8000, scoped, tag = 'input window, operand 2, single buffered']
    #allocation8 [shape = 's32[1]{0}', space=sflag, size = 0x4, scoped, tag = 'scoped memory for tpu_custom_call.1']
    #allocation9 [shape = 'u8[512]{0}', space=vmem, size = 0x400, scoped, tag = 'input window, operand 3, single buffered']
    #allocation10 [shape = 'u8[32768]{0}', space=vmem, size = 0x8000, scoped, tag = 'input window, operand 4, single buffered']
    #allocation11 [shape = 's32[1]{0}', space=sflag, size = 0x4, scoped, tag = 'scoped memory for tpu_custom_call.1']
    #allocation12 [shape = 'u8[512]{0}', space=vmem, size = 0x400, scoped, tag = 'input window, operand 5, single buffered']
    #allocation13 [shape = 'u8[131072]{0}', space=vmem, size = 0x20000, scoped, tag = 'input window, operand 6']
    #allocation14 [shape = 's32[2]{0}', space=sflag, size = 0x8, scoped, tag = 'scoped memory for tpu_custom_call.1']
    #allocation15 [shape = 'u8[512]{0}', space=vmem, size = 0x400, scoped, tag = 'input window, operand 7, single buffered']
    #allocation16 [shape = 'u8[1024]{0}', space=vmem, size = 0x400, scoped, tag = 'input window, operand 9']
    #allocation17 [shape = 's32[2]{0}', space=sflag, size = 0x8, scoped, tag = 'scoped memory for tpu_custom_call.1']
    #allocation18 [shape = 'u8[1024]{0}', space=vmem, size = 0x400, scoped, tag = 'input window, operand 10']
    #allocation19 [shape = 'u8[1024]{0}', space=vmem, size = 0x400, scoped, tag = 'input window, operand 12']
    #allocation20 [shape = 's32[2]{0}', space=sflag, size = 0x8, scoped, tag = 'scoped memory for tpu_custom_call.1']
    #allocation21 [shape = 'u8[32768]{0}', space=vmem, size = 0x8000, scoped, tag = 'output window, operand 0']
    %26 = vsyncpa [#allocation5], 0
    %s27 = scalar_lea.sflag [#allocation5], 1
    %28 = vsyncpa %s27, 0
    %29 = vsyncpa [#allocation8], 0
    %30 = vsyncpa [#allocation11], 0
    %31 = vsyncpa [#allocation14], 0
    %s32 = scalar_lea.sflag [#allocation14], 1
    %33 = vsyncpa %s32, 0
    %34 = vsyncpa [#allocation17], 0
    %s35 = scalar_lea.sflag [#allocation17], 1
    %36 = vsyncpa %s35, 0
    %37 = vsyncpa [#allocation20], 0
    %s38 = scalar_lea.sflag [#allocation20], 1
    %39 = vsyncpa %s38, 0
    %40 = vsyncpa [#allocation6], 0
    %s41 = scalar_lea.sflag [#allocation6], 1
    %42 = vsyncpa %s41, 0
    loop: start=0, step=1, limit=7
    $region2: #{tpu_custom_call.1} parent=1 // loop_pre_header
      _
    $region3: #{tpu_custom_call.1} parent=1 // loop_header
      %s44 = sphi 0, %s48
      %p45 = scmp.ge.s32.totalorder %s44, 7
      %s54 = sphi 0, %s56
      %s57 = sphi 0, %s54
      %s58 = sphi 0, %s57
      %s74 = sphi 0, %s58
      %s78 = sphi 0, %s78
      %s80 = sphi 0, %s78
      %s81 = sphi 0, %s80
      %s95 = sphi 0, %s81
      %s99 = sphi 0, %s99
      %s101 = sphi 0, %s99
      %s102 = sphi 0, %s101
      %s116 = sphi 0, %s102
      %s120 = sphi 0, %s120
      %s122 = sphi 0, %s120
      %s123 = sphi 0, %s122
      %s137 = sphi 0, %s123
      %s141 = sphi 0, %s141
      %s143 = sphi 0, %s141
      %s144 = sphi 0, %s143
      %s158 = sphi 0, %s144
      %s166 = sphi 0, %s168
      %s169 = sphi 0, %s166
      %s170 = sphi 0, %s169
      %s186 = sphi 0, %s170
      %s190 = sphi 0, %s190
      %s192 = sphi 0, %s190
      %s193 = sphi 0, %s192
      %s207 = sphi 0, %s193
      %s215 = sphi 0, %s217
      %s218 = sphi 0, %s215
      %s219 = sphi 0, %s218
      %s235 = sphi 0, %s219
      %s243 = sphi 0, %s245
      %s246 = sphi 0, %s243
      %s247 = sphi 0, %s246
      %s263 = sphi 0, %s247
      %s271 = sphi 0, %s273
      %s274 = sphi 0, %s271
      %s275 = sphi 0, %s274
      %s291 = sphi 0, %s275
      %s299 = sphi 0, %s301
      %s302 = sphi 0, %s299
      %s303 = sphi 0, %s302
      %s319 = sphi 0, %s303
      %s327 = sphi 0, %s329
      %s330 = sphi 0, %s327
      %s331 = sphi 0, %s330
      %s347 = sphi 0, %s331
      %s353 = sphi 0, %s355
      %s356 = sphi 0, %s353
      %s357 = sphi 0, %s356
      %s373 = sphi 0, %s357
    $region4: #{tpu_custom_call.1} parent=1 // loop_header_branch
      %47 = sbr.rel (%p45) target = $region8
    $region5: #{tpu_custom_call.1} parent=1 // loop_body
      %s49 = ssub.s32 %s44, 1
      %s50 = ssub.s32 %s44, 2
      %s51 = sadd.s32 %s44, 1
      %s52 = ssub.s32 %s44, %s51
      %p53 = scmp.eq.s32.totalorder %s52, 0
      %s55 = sadd.s32 %s54, 1
      %s56 = scalar_select %p53, %s54, %s55
      %p59 = pneg %p53
      %p60 = scmp.eq.s32.totalorder %s44, 4
      %p61 = por %p59, %p60
      %p62 = scmp.ne.s32.totalorder %s54, %s57
      %p63 = scmp.eq.s32.totalorder %s44, 0
      %p64 = por %p62, %p63
      %p65 = scmp.ne.s32.totalorder %s54, %s57
      %p66 = scmp.eq.s32.totalorder %s49, 4
      %p67 = por %p65, %p66
      %p68 = scmp.ne.s32.totalorder %s57, %s58
      %p69 = scmp.eq.s32.totalorder %s49, 0
      %p70 = por %p68, %p69
      %p71 = scmp.ne.s32.totalorder %s57, %s58
      %p72 = scmp.eq.s32.totalorder %s50, 4
      %p73 = por %p71, %p72
      %p75 = scmp.ne.s32.totalorder %s58, %s74
      %p76 = scmp.eq.s32.totalorder %s50, 0
      %p77 = por %p75, %p76
      %s79 = sadd.s32 %s78, 1
      %p82 = scmp.eq.s32.totalorder %s44, 4
      %p83 = scmp.ne.s32.totalorder %s78, %s80
      %p84 = scmp.eq.s32.totalorder %s44, 0
      %p85 = por %p83, %p84
      %p86 = scmp.ne.s32.totalorder %s78, %s80
      %p87 = scmp.eq.s32.totalorder %s49, 4
      %p88 = por %p86, %p87
      %p89 = scmp.ne.s32.totalorder %s80, %s81
      %p90 = scmp.eq.s32.totalorder %s49, 0
      %p91 = por %p89, %p90
      %p92 = scmp.ne.s32.totalorder %s80, %s81
      %p93 = scmp.eq.s32.totalorder %s50, 4
      %p94 = por %p92, %p93
      %p96 = scmp.ne.s32.totalorder %s81, %s95
      %p97 = scmp.eq.s32.totalorder %s50, 0
      %p98 = por %p96, %p97
      %s100 = sadd.s32 %s99, 1
      %p103 = scmp.eq.s32.totalorder %s44, 4
      %p104 = scmp.ne.s32.totalorder %s99, %s101
      %p105 = scmp.eq.s32.totalorder %s44, 0
      %p106 = por %p104, %p105
      %p107 = scmp.ne.s32.totalorder %s99, %s101
      %p108 = scmp.eq.s32.totalorder %s49, 4
      %p109 = por %p107, %p108
      %p110 = scmp.ne.s32.totalorder %s101, %s102
      %p111 = scmp.eq.s32.totalorder %s49, 0
      %p112 = por %p110, %p111
      %p113 = scmp.ne.s32.totalorder %s101, %s102
      %p114 = scmp.eq.s32.totalorder %s50, 4
      %p115 = por %p113, %p114
      %p117 = scmp.ne.s32.totalorder %s102, %s116
      %p118 = scmp.eq.s32.totalorder %s50, 0
      %p119 = por %p117, %p118
      %s121 = sadd.s32 %s120, 1
      %p124 = scmp.eq.s32.totalorder %s44, 4
      %p125 = scmp.ne.s32.totalorder %s120, %s122
      %p126 = scmp.eq.s32.totalorder %s44, 0
      %p127 = por %p125, %p126
      %p128 = scmp.ne.s32.totalorder %s120, %s122
      %p129 = scmp.eq.s32.totalorder %s49, 4
      %p130 = por %p128, %p129
      %p131 = scmp.ne.s32.totalorder %s122, %s123
      %p132 = scmp.eq.s32.totalorder %s49, 0
      %p133 = por %p131, %p132
      %p134 = scmp.ne.s32.totalorder %s122, %s123
      %p135 = scmp.eq.s32.totalorder %s50, 4
      %p136 = por %p134, %p135
      %p138 = scmp.ne.s32.totalorder %s123, %s137
      %p139 = scmp.eq.s32.totalorder %s50, 0
      %p140 = por %p138, %p139
      %s142 = sadd.s32 %s141, 1
      %p145 = scmp.eq.s32.totalorder %s44, 4
      %p146 = scmp.ne.s32.totalorder %s141, %s143
      %p147 = scmp.eq.s32.totalorder %s44, 0
      %p148 = por %p146, %p147
      %p149 = scmp.ne.s32.totalorder %s141, %s143
      %p150 = scmp.eq.s32.totalorder %s49, 4
      %p151 = por %p149, %p150
      %p152 = scmp.ne.s32.totalorder %s143, %s144
      %p153 = scmp.eq.s32.totalorder %s49, 0
      %p154 = por %p152, %p153
      %p155 = scmp.ne.s32.totalorder %s143, %s144
      %p156 = scmp.eq.s32.totalorder %s50, 4
      %p157 = por %p155, %p156
      %p159 = scmp.ne.s32.totalorder %s144, %s158
      %p160 = scmp.eq.s32.totalorder %s50, 0
      %p161 = por %p159, %p160
      %s162 = sld [smem:[#allocation3 + %s44]]
      %s163 = sld [smem:[#allocation3 + %s51]]
      %s164 = ssub.s32 %s162, %s163
      %p165 = scmp.eq.s32.totalorder %s164, 0
      %s167 = sadd.s32 %s166, 1
      %s168 = scalar_select %p165, %s166, %s167
      %p171 = pneg %p165
      %p172 = scmp.eq.s32.totalorder %s44, 4
      %p173 = por %p171, %p172
      %p174 = scmp.ne.s32.totalorder %s166, %s169
      %p175 = scmp.eq.s32.totalorder %s44, 0
      %p176 = por %p174, %p175
      %p177 = scmp.ne.s32.totalorder %s166, %s169
      %p178 = scmp.eq.s32.totalorder %s49, 4
      %p179 = por %p177, %p178
      %p180 = scmp.ne.s32.totalorder %s169, %s170
      %p181 = scmp.eq.s32.totalorder %s49, 0
      %p182 = por %p180, %p181
      %p183 = scmp.ne.s32.totalorder %s169, %s170
      %p184 = scmp.eq.s32.totalorder %s50, 4
      %p185 = por %p183, %p184
      %p187 = scmp.ne.s32.totalorder %s170, %s186
      %p188 = scmp.eq.s32.totalorder %s50, 0
      %p189 = por %p187, %p188
      %s191 = sadd.s32 %s190, 1
      %p194 = scmp.eq.s32.totalorder %s44, 4
      %p195 = scmp.ne.s32.totalorder %s190, %s192
      %p196 = scmp.eq.s32.totalorder %s44, 0
      %p197 = por %p195, %p196
      %p198 = scmp.ne.s32.totalorder %s190, %s192
      %p199 = scmp.eq.s32.totalorder %s49, 4
      %p200 = por %p198, %p199
      %p201 = scmp.ne.s32.totalorder %s192, %s193
      %p202 = scmp.eq.s32.totalorder %s49, 0
      %p203 = por %p201, %p202
      %p204 = scmp.ne.s32.totalorder %s192, %s193
      %p205 = scmp.eq.s32.totalorder %s50, 4
      %p206 = por %p204, %p205
      %p208 = scmp.ne.s32.totalorder %s193, %s207
      %p209 = scmp.eq.s32.totalorder %s50, 0
      %p210 = por %p208, %p209
      %s211 = sld [smem:[#allocation3 + %s44]]
      %s212 = sld [smem:[#allocation3 + %s51]]
      %s213 = ssub.s32 %s211, %s212
      %p214 = scmp.eq.s32.totalorder %s213, 0
      %s216 = sadd.s32 %s215, 1
      %s217 = scalar_select %p214, %s215, %s216
      %p220 = pneg %p214
      %p221 = scmp.eq.s32.totalorder %s44, 4
      %p222 = por %p220, %p221
      %p223 = scmp.ne.s32.totalorder %s215, %s218
      %p224 = scmp.eq.s32.totalorder %s44, 0
      %p225 = por %p223, %p224
      %p226 = scmp.ne.s32.totalorder %s215, %s218
      %p227 = scmp.eq.s32.totalorder %s49, 4
      %p228 = por %p226, %p227
      %p229 = scmp.ne.s32.totalorder %s218, %s219
      %p230 = scmp.eq.s32.totalorder %s49, 0
      %p231 = por %p229, %p230
      %p232 = scmp.ne.s32.totalorder %s218, %s219
      %p233 = scmp.eq.s32.totalorder %s50, 4
      %p234 = por %p232, %p233
      %p236 = scmp.ne.s32.totalorder %s219, %s235
      %p237 = scmp.eq.s32.totalorder %s50, 0
      %p238 = por %p236, %p237
      %s239 = sld [smem:[#allocation3 + %s44]]
      %s240 = sld [smem:[#allocation3 + %s51]]
      %s241 = ssub.s32 %s239, %s240
      %p242 = scmp.eq.s32.totalorder %s241, 0
      %s244 = sadd.s32 %s243, 1
      %s245 = scalar_select %p242, %s243, %s244
      %p248 = pneg %p242
      %p249 = scmp.eq.s32.totalorder %s44, 4
      %p250 = por %p248, %p249
      %p251 = scmp.ne.s32.totalorder %s243, %s246
      %p252 = scmp.eq.s32.totalorder %s44, 0
      %p253 = por %p251, %p252
      %p254 = scmp.ne.s32.totalorder %s243, %s246
      %p255 = scmp.eq.s32.totalorder %s49, 4
      %p256 = por %p254, %p255
      %p257 = scmp.ne.s32.totalorder %s246, %s247
      %p258 = scmp.eq.s32.totalorder %s49, 0
      %p259 = por %p257, %p258
      %p260 = scmp.ne.s32.totalorder %s246, %s247
      %p261 = scmp.eq.s32.totalorder %s50, 4
      %p262 = por %p260, %p261
      %p264 = scmp.ne.s32.totalorder %s247, %s263
      %p265 = scmp.eq.s32.totalorder %s50, 0
      %p266 = por %p264, %p265
      %s267 = sld [smem:[#allocation3 + %s44]]
      %s268 = sld [smem:[#allocation3 + %s51]]
      %s269 = ssub.s32 %s267, %s268
      %p270 = scmp.eq.s32.totalorder %s269, 0
      %s272 = sadd.s32 %s271, 1
      %s273 = scalar_select %p270, %s271, %s272
      %p276 = pneg %p270
      %p277 = scmp.eq.s32.totalorder %s44, 4
      %p278 = por %p276, %p277
      %p279 = scmp.ne.s32.totalorder %s271, %s274
      %p280 = scmp.eq.s32.totalorder %s44, 0
      %p281 = por %p279, %p280
      %p282 = scmp.ne.s32.totalorder %s271, %s274
      %p283 = scmp.eq.s32.totalorder %s49, 4
      %p284 = por %p282, %p283
      %p285 = scmp.ne.s32.totalorder %s274, %s275
      %p286 = scmp.eq.s32.totalorder %s49, 0
      %p287 = por %p285, %p286
      %p288 = scmp.ne.s32.totalorder %s274, %s275
      %p289 = scmp.eq.s32.totalorder %s50, 4
      %p290 = por %p288, %p289
      %p292 = scmp.ne.s32.totalorder %s275, %s291
      %p293 = scmp.eq.s32.totalorder %s50, 0
      %p294 = por %p292, %p293
      %s295 = sld [smem:[#allocation3 + %s44]]
      %s296 = sld [smem:[#allocation3 + %s51]]
      %s297 = ssub.s32 %s295, %s296
      %p298 = scmp.eq.s32.totalorder %s297, 0
      %s300 = sadd.s32 %s299, 1
      %s301 = scalar_select %p298, %s299, %s300
      %p304 = pneg %p298
      %p305 = scmp.eq.s32.totalorder %s44, 4
      %p306 = por %p304, %p305
      %p307 = scmp.ne.s32.totalorder %s299, %s302
      %p308 = scmp.eq.s32.totalorder %s44, 0
      %p309 = por %p307, %p308
      %p310 = scmp.ne.s32.totalorder %s299, %s302
      %p311 = scmp.eq.s32.totalorder %s49, 4
      %p312 = por %p310, %p311
      %p313 = scmp.ne.s32.totalorder %s302, %s303
      %p314 = scmp.eq.s32.totalorder %s49, 0
      %p315 = por %p313, %p314
      %p316 = scmp.ne.s32.totalorder %s302, %s303
      %p317 = scmp.eq.s32.totalorder %s50, 4
      %p318 = por %p316, %p317
      %p320 = scmp.ne.s32.totalorder %s303, %s319
      %p321 = scmp.eq.s32.totalorder %s50, 0
      %p322 = por %p320, %p321
      %s323 = sld [smem:[#allocation3 + %s44]]
      %s324 = sld [smem:[#allocation3 + %s51]]
      %s325 = ssub.s32 %s323, %s324
      %p326 = scmp.eq.s32.totalorder %s325, 0
      %s328 = sadd.s32 %s327, 1
      %s329 = scalar_select %p326, %s327, %s328
      %p332 = pneg %p326
      %p333 = scmp.eq.s32.totalorder %s44, 4
      %p334 = por %p332, %p333
      %p335 = scmp.ne.s32.totalorder %s327, %s330
      %p336 = scmp.eq.s32.totalorder %s44, 0
      %p337 = por %p335, %p336
      %p338 = scmp.ne.s32.totalorder %s327, %s330
      %p339 = scmp.eq.s32.totalorder %s49, 4
      %p340 = por %p338, %p339
      %p341 = scmp.ne.s32.totalorder %s330, %s331
      %p342 = scmp.eq.s32.totalorder %s49, 0
      %p343 = por %p341, %p342
      %p344 = scmp.ne.s32.totalorder %s330, %s331
      %p345 = scmp.eq.s32.totalorder %s50, 4
      %p346 = por %p344, %p345
      %p348 = scmp.ne.s32.totalorder %s331, %s347
      %p349 = scmp.eq.s32.totalorder %s50, 0
      %p350 = por %p348, %p349
      %s351 = ssub.s32 %s44, %s51
      %p352 = scmp.eq.s32.totalorder %s351, 0
      %s354 = sadd.s32 %s353, 1
      %s355 = scalar_select %p352, %s353, %s354
      %p358 = pneg %p352
      %p359 = scmp.eq.s32.totalorder %s44, 4
      %p360 = por %p358, %p359
      %p361 = scmp.ne.s32.totalorder %s353, %s356
      %p362 = scmp.eq.s32.totalorder %s44, 0
      %p363 = por %p361, %p362
      %p364 = scmp.ne.s32.totalorder %s353, %s356
      %p365 = scmp.eq.s32.totalorder %s49, 4
      %p366 = por %p364, %p365
      %p367 = scmp.ne.s32.totalorder %s356, %s357
      %p368 = scmp.eq.s32.totalorder %s49, 0
      %p369 = por %p367, %p368
      %p370 = scmp.ne.s32.totalorder %s356, %s357
      %p371 = scmp.eq.s32.totalorder %s50, 4
      %p372 = por %p370, %p371
      %p374 = scmp.ne.s32.totalorder %s357, %s373
      %p375 = scmp.eq.s32.totalorder %s50, 0
      %p376 = por %p374, %p375
      %p377 = scmp.le.s32.totalorder 1, %s44
      %p378 = scmp.lt.s32.totalorder %s44, 6
      %p379 = pnand %p377, %p378
      %p380 = pneg %p379
      // Predicated region
      $region9: #{tpu_custom_call.1} parent=5 // pred_check
        _
      $region10: #{tpu_custom_call.1} parent=5 // pred_check_branch
        %382 = sbr.rel (%p379) target = $region12
      $region11: #{tpu_custom_call.1} parent=5 // pred_region
        %s383 = ssub.s32 %s44, 1
        // Predicated region
        $region13: #{tpu_custom_call.1} parent=11 // pred_check
          %p384 = pneg %p91
        $region14: #{tpu_custom_call.1} parent=11 // pred_check_branch
          %386 = sbr.rel (%p384) target = $region16
        $region15: #{tpu_custom_call.1} parent=11 // pred_region
          %388 = vsyncadd [#allocation8], 0
          %s389 = sshll.u32 %s2, 4
          %s390 = int_to_ptr.hbm [resolvable:$true] %s389
          %s391 = sshll.u32 [#allocation7], 4
          %s392 = int_to_ptr.vmem [resolvable:$true] %s391
          %397 = dma.hbm_to_vmem [thread:$0]  %s390, 1024, %s392, [#allocation8], 64, 64, 4
        $region16: #{tpu_custom_call.1} parent=11 // pred_fallthru
          _
        // Predicated region
        $region17: #{tpu_custom_call.1} parent=11 // pred_check
          %p398 = pneg %p112
        $region18: #{tpu_custom_call.1} parent=11 // pred_check_branch
          %400 = sbr.rel (%p398) target = $region20
        $region19: #{tpu_custom_call.1} parent=11 // pred_region
          %402 = vsyncadd [#allocation8], 0
          %s404 = sshll.u32 %s3, 4
          %s405 = int_to_ptr.hbm [resolvable:$true] %s404
          %s406 = sshll.u32 [#allocation9], 4
          %s407 = int_to_ptr.vmem [resolvable:$true] %s406
          %409 = dma.hbm_to_vmem [thread:$0]  %s405, 16, %s407, [#allocation8]
        $region20: #{tpu_custom_call.1} parent=11 // pred_fallthru
          _
        // Predicated region
        $region21: #{tpu_custom_call.1} parent=11 // pred_check
          %p410 = pneg %p133
        $region22: #{tpu_custom_call.1} parent=11 // pred_check_branch
          %412 = sbr.rel (%p410) target = $region24
        $region23: #{tpu_custom_call.1} parent=11 // pred_region
          %414 = vsyncadd [#allocation11], 0
          %s415 = sshll.u32 %s4, 4
          %s416 = int_to_ptr.hbm [resolvable:$true] %s415
          %s417 = sshll.u32 [#allocation10], 4
          %s418 = int_to_ptr.vmem [resolvable:$true] %s417
          %423 = dma.hbm_to_vmem [thread:$0]  %s416, 1024, %s418, [#allocation11], 64, 64, 4
        $region24: #{tpu_custom_call.1} parent=11 // pred_fallthru
          _
        // Predicated region
        $region25: #{tpu_custom_call.1} parent=11 // pred_check
          %p424 = pneg %p154
        $region26: #{tpu_custom_call.1} parent=11 // pred_check_branch
          %426 = sbr.rel (%p424) target = $region28
        $region27: #{tpu_custom_call.1} parent=11 // pred_region
          %428 = vsyncadd [#allocation11], 0
          %s430 = sshll.u32 %s5, 4
          %s431 = int_to_ptr.hbm [resolvable:$true] %s430
          %s432 = sshll.u32 [#allocation12], 4
          %s433 = int_to_ptr.vmem [resolvable:$true] %s432
          %435 = dma.hbm_to_vmem [thread:$0]  %s431, 16, %s433, [#allocation11]
        $region28: #{tpu_custom_call.1} parent=11 // pred_fallthru
          _
        // Predicated region
        $region29: #{tpu_custom_call.1} parent=11 // pred_check
          %p436 = pneg %p203
        $region30: #{tpu_custom_call.1} parent=11 // pred_check_branch
          %438 = sbr.rel (%p436) target = $region32
        $region31: #{tpu_custom_call.1} parent=11 // pred_region
          %440 = vsyncadd [#allocation14], 0
          %s442 = sshll.u32 %s7, 4
          %s443 = int_to_ptr.hbm [resolvable:$true] %s442
          %s444 = sshll.u32 [#allocation15], 4
          %s445 = int_to_ptr.vmem [resolvable:$true] %s444
          %447 = dma.hbm_to_vmem [thread:$0]  %s443, 16, %s445, [#allocation14]
        $region32: #{tpu_custom_call.1} parent=11 // pred_fallthru
          _
      $region12: #{tpu_custom_call.1} parent=5 // pred_fallthru
        _
      %p448 = scmp.lt.s32.totalorder %s44, 5
      // Predicated region
      $region33: #{tpu_custom_call.1} parent=5 // pred_check
        %p449 = pneg %p448
      $region34: #{tpu_custom_call.1} parent=5 // pred_check_branch
        %451 = sbr.rel (%p449) target = $region36
      $region35: #{tpu_custom_call.1} parent=5 // pred_region
        // Predicated region
        $region37: #{tpu_custom_call.1} parent=35 // pred_check
          %p452 = pneg %p64
        $region38: #{tpu_custom_call.1} parent=35 // pred_check_branch
          %454 = sbr.rel (%p452) target = $region40
        $region39: #{tpu_custom_call.1} parent=35 // pred_region
          %s455 = sand.u32 %s54, 1
          %s456 = scalar_lea.sflag [#allocation5], %s455
          %s457 = sand.u32 %s54, 1
          %s458 = smul.addr %s457, 32
          %s459 = scalar_lea.vmem [#allocation4], %s458
          %s460 = smul.u32 4, %s44
          %462 = vsyncadd %s456, 0
          %s463 = smul.addr %s460, 8
          %s464 = scalar_lea.hbm %s1, %s463
          %s465 = sshll.u32 %s464, 4
          %s466 = int_to_ptr.hbm [resolvable:$true] %s465
          %s467 = sshll.u32 %s459, 4
          %s468 = int_to_ptr.vmem [resolvable:$true] %s467
          %473 = dma.hbm_to_vmem [thread:$0]  %s466, 512, %s468, %s456, 128, 128, 8
        $region40: #{tpu_custom_call.1} parent=35 // pred_fallthru
          _
        // Predicated region
        $region41: #{tpu_custom_call.1} parent=35 // pred_check
          %p474 = pneg %p176
        $region42: #{tpu_custom_call.1} parent=35 // pred_check_branch
          %476 = sbr.rel (%p474) target = $region44
        $region43: #{tpu_custom_call.1} parent=35 // pred_region
          %s477 = sand.u32 %s44, 1
          %s478 = scalar_lea.sflag [#allocation14], %s477
          %s479 = sand.u32 %s166, 1
          %s480 = smul.addr %s479, 128
          %s481 = scalar_lea.vmem [#allocation13], %s480
          %s482 = sld [smem:[#allocation3 + %s44]]
          %484 = vsyncadd %s478, 0
          %s485 = smul.addr %s482, 32
          %s486 = smul.addr %s485, 4
          %s487 = scalar_lea.hbm %s6, %s486
          %s488 = sshll.u32 %s487, 4
          %s489 = int_to_ptr.hbm [resolvable:$true] %s488
          %s490 = sshll.u32 %s481, 4
          %s491 = int_to_ptr.vmem [resolvable:$true] %s490
          %496 = dma.hbm_to_vmem [thread:$0]  %s489, 2048, %s491, %s478, 128, 128, 8
        $region44: #{tpu_custom_call.1} parent=35 // pred_fallthru
          _
        // Predicated region
        $region45: #{tpu_custom_call.1} parent=35 // pred_check
          %p497 = pneg %p225
        $region46: #{tpu_custom_call.1} parent=35 // pred_check_branch
          %499 = sbr.rel (%p497) target = $region48
        $region47: #{tpu_custom_call.1} parent=35 // pred_region
          %s500 = sld [smem:[#allocation3 + %s44]]
          %p501 = scmp.lt.s32.totalorder %s500, 4
          %s502 = scalar_select %p501, %s500, 4
          %s503 = scalar_lea.vmem %s8, %s502
          %s504 = sld [smem:[#allocation3 + %s44]]
        $region48: #{tpu_custom_call.1} parent=35 // pred_fallthru
          _
        // Predicated region
        $region49: #{tpu_custom_call.1} parent=35 // pred_check
          %p505 = pneg %p253
        $region50: #{tpu_custom_call.1} parent=35 // pred_check_branch
          %507 = sbr.rel (%p505) target = $region52
        $region51: #{tpu_custom_call.1} parent=35 // pred_region
          %s508 = sand.u32 %s44, 1
          %s509 = scalar_lea.sflag [#allocation17], %s508
          %s510 = sand.u32 %s243, 1
          %s511 = scalar_lea.vmem [#allocation16], %s510
          %s512 = sld [smem:[#allocation3 + %s44]]
          %514 = vsyncadd %s509, 0
          %s515 = scalar_lea.hbm %s9, %s512
          %s517 = sshll.u32 %s515, 4
          %s518 = int_to_ptr.hbm [resolvable:$true] %s517
          %s519 = sshll.u32 %s511, 4
          %s520 = int_to_ptr.vmem [resolvable:$true] %s519
          %522 = dma.hbm_to_vmem [thread:$0]  %s518, 16, %s520, %s509
        $region52: #{tpu_custom_call.1} parent=35 // pred_fallthru
          _
        // Predicated region
        $region53: #{tpu_custom_call.1} parent=35 // pred_check
          %p523 = pneg %p281
        $region54: #{tpu_custom_call.1} parent=35 // pred_check_branch
          %525 = sbr.rel (%p523) target = $region56
        $region55: #{tpu_custom_call.1} parent=35 // pred_region
          %s526 = sand.u32 %s44, 1
          %s527 = scalar_lea.sflag [#allocation17], %s526
          %s528 = sand.u32 %s271, 1
          %s529 = scalar_lea.vmem [#allocation18], %s528
          %s530 = sld [smem:[#allocation3 + %s44]]
          %532 = vsyncadd %s527, 0
          %s533 = scalar_lea.hbm %s10, %s530
          %s535 = sshll.u32 %s533, 4
          %s536 = int_to_ptr.hbm [resolvable:$true] %s535
          %s537 = sshll.u32 %s529, 4
          %s538 = int_to_ptr.vmem [resolvable:$true] %s537
          %540 = dma.hbm_to_vmem [thread:$0]  %s536, 16, %s538, %s527
        $region56: #{tpu_custom_call.1} parent=35 // pred_fallthru
          _
        // Predicated region
        $region57: #{tpu_custom_call.1} parent=35 // pred_check
          %p541 = pneg %p309
        $region58: #{tpu_custom_call.1} parent=35 // pred_check_branch
          %543 = sbr.rel (%p541) target = $region60
        $region59: #{tpu_custom_call.1} parent=35 // pred_region
          %s544 = sld [smem:[#allocation3 + %s44]]
          %p545 = scmp.lt.s32.totalorder %s544, 4
          %s546 = scalar_select %p545, %s544, 4
          %s547 = scalar_lea.vmem %s11, %s546
          %s548 = sld [smem:[#allocation3 + %s44]]
        $region60: #{tpu_custom_call.1} parent=35 // pred_fallthru
          _
        // Predicated region
        $region61: #{tpu_custom_call.1} parent=35 // pred_check
          %p549 = pneg %p337
        $region62: #{tpu_custom_call.1} parent=35 // pred_check_branch
          %551 = sbr.rel (%p549) target = $region64
        $region63: #{tpu_custom_call.1} parent=35 // pred_region
          %s552 = sand.u32 %s327, 1
          %s553 = scalar_lea.sflag [#allocation20], %s552
          %s554 = sand.u32 %s327, 1
          %s555 = scalar_lea.vmem [#allocation19], %s554
          %s556 = sld [smem:[#allocation3 + %s44]]
          %558 = vsyncadd %s553, 0
          %s559 = scalar_lea.hbm %s12, %s556
          %s561 = sshll.u32 %s559, 4
          %s562 = int_to_ptr.hbm [resolvable:$true] %s561
          %s563 = sshll.u32 %s555, 4
          %s564 = int_to_ptr.vmem [resolvable:$true] %s563
          %566 = dma.hbm_to_vmem [thread:$0]  %s562, 16, %s564, %s553
        $region64: #{tpu_custom_call.1} parent=35 // pred_fallthru
          _
      $region36: #{tpu_custom_call.1} parent=5 // pred_fallthru
        _
      %p567 = scmp.le.s32.totalorder 1, %s44
      %p568 = scmp.lt.s32.totalorder %s44, 6
      %p569 = pnand %p567, %p568
      %p570 = pneg %p569
      // Predicated region
      $region65: #{tpu_custom_call.1} parent=5 // pred_check
        _
      $region66: #{tpu_custom_call.1} parent=5 // pred_check_branch
        %572 = sbr.rel (%p569) target = $region68
      $region67: #{tpu_custom_call.1} parent=5 // pred_region
        %s573 = ssub.s32 %s44, 1
        %s574 = sand.u32 %s57, 1
        %s575 = scalar_lea.sflag [#allocation5], %s574
        %s576 = sand.u32 %s57, 1
        %s577 = smul.addr %s576, 32
        %s578 = scalar_lea.vmem [#allocation4], %s577
        // Predicated region
        $region69: #{tpu_custom_call.1} parent=67 // pred_check
          %p579 = pneg %p70
        $region70: #{tpu_custom_call.1} parent=67 // pred_check_branch
          %581 = sbr.rel (%p579) target = $region72
        $region71: #{tpu_custom_call.1} parent=67 // pred_region
          %583 = dma.done %s575, 512
        $region72: #{tpu_custom_call.1} parent=67 // pred_fallthru
          _
        // Predicated region
        $region73: #{tpu_custom_call.1} parent=67 // pred_check
          %p584 = pneg %p91
        $region74: #{tpu_custom_call.1} parent=67 // pred_check_branch
          %586 = sbr.rel (%p584) target = $region76
        $region75: #{tpu_custom_call.1} parent=67 // pred_region
          %588 = dma.done [#allocation8], 1024
        $region76: #{tpu_custom_call.1} parent=67 // pred_fallthru
          _
        // Predicated region
        $region77: #{tpu_custom_call.1} parent=67 // pred_check
          %p589 = pneg %p112
        $region78: #{tpu_custom_call.1} parent=67 // pred_check_branch
          %591 = sbr.rel (%p589) target = $region80
        $region79: #{tpu_custom_call.1} parent=67 // pred_region
          %593 = dma.done [#allocation8], 16
        $region80: #{tpu_custom_call.1} parent=67 // pred_fallthru
          _
        // Predicated region
        $region81: #{tpu_custom_call.1} parent=67 // pred_check
          %p594 = pneg %p133
        $region82: #{tpu_custom_call.1} parent=67 // pred_check_branch
          %596 = sbr.rel (%p594) target = $region84
        $region83: #{tpu_custom_call.1} parent=67 // pred_region
          %598 = dma.done [#allocation11], 1024
        $region84: #{tpu_custom_call.1} parent=67 // pred_fallthru
          _
        // Predicated region
        $region85: #{tpu_custom_call.1} parent=67 // pred_check
          %p599 = pneg %p154
        $region86: #{tpu_custom_call.1} parent=67 // pred_check_branch
          %601 = sbr.rel (%p599) target = $region88
        $region87: #{tpu_custom_call.1} parent=67 // pred_region
          %603 = dma.done [#allocation11], 16
        $region88: #{tpu_custom_call.1} parent=67 // pred_fallthru
          _
        %s604 = sand.u32 %s49, 1
        %s605 = scalar_lea.sflag [#allocation14], %s604
        %s606 = sand.u32 %s169, 1
        %s607 = smul.addr %s606, 128
        %s608 = scalar_lea.vmem [#allocation13], %s607
        // Predicated region
        $region89: #{tpu_custom_call.1} parent=67 // pred_check
          %p609 = pneg %p182
        $region90: #{tpu_custom_call.1} parent=67 // pred_check_branch
          %611 = sbr.rel (%p609) target = $region92
        $region91: #{tpu_custom_call.1} parent=67 // pred_region
          %613 = dma.done %s605, 2048
        $region92: #{tpu_custom_call.1} parent=67 // pred_fallthru
          _
        // Predicated region
        $region93: #{tpu_custom_call.1} parent=67 // pred_check
          %p614 = pneg %p203
        $region94: #{tpu_custom_call.1} parent=67 // pred_check_branch
          %616 = sbr.rel (%p614) target = $region96
        $region95: #{tpu_custom_call.1} parent=67 // pred_region
          %618 = dma.done [#allocation14], 16
        $region96: #{tpu_custom_call.1} parent=67 // pred_fallthru
          _
        %s619 = sand.u32 %s49, 1
        %s620 = scalar_lea.sflag [#allocation17], %s619
        %s621 = sand.u32 %s246, 1
        %s622 = scalar_lea.vmem [#allocation16], %s621
        // Predicated region
        $region97: #{tpu_custom_call.1} parent=67 // pred_check
          %p623 = pneg %p259
        $region98: #{tpu_custom_call.1} parent=67 // pred_check_branch
          %625 = sbr.rel (%p623) target = $region100
        $region99: #{tpu_custom_call.1} parent=67 // pred_region
          %627 = dma.done %s620, 16
        $region100: #{tpu_custom_call.1} parent=67 // pred_fallthru
          _
        %s628 = sand.u32 %s49, 1
        %s629 = scalar_lea.sflag [#allocation17], %s628
        %s630 = sand.u32 %s274, 1
        %s631 = scalar_lea.vmem [#allocation18], %s630
        // Predicated region
        $region101: #{tpu_custom_call.1} parent=67 // pred_check
          %p632 = pneg %p287
        $region102: #{tpu_custom_call.1} parent=67 // pred_check_branch
          %634 = sbr.rel (%p632) target = $region104
        $region103: #{tpu_custom_call.1} parent=67 // pred_region
          %636 = dma.done %s629, 16
        $region104: #{tpu_custom_call.1} parent=67 // pred_fallthru
          _
        %s637 = sand.u32 %s330, 1
        %s638 = scalar_lea.sflag [#allocation20], %s637
        %s639 = sand.u32 %s330, 1
        %s640 = scalar_lea.vmem [#allocation19], %s639
        // Predicated region
        $region105: #{tpu_custom_call.1} parent=67 // pred_check
          %p641 = pneg %p343
        $region106: #{tpu_custom_call.1} parent=67 // pred_check_branch
          %643 = sbr.rel (%p641) target = $region108
        $region107: #{tpu_custom_call.1} parent=67 // pred_region
          %645 = dma.done %s638, 16
        $region108: #{tpu_custom_call.1} parent=67 // pred_fallthru
          _
        %s646 = sand.u32 %s57, 1
        %s647 = scalar_lea.sflag [#allocation5], %s646
        %s648 = sand.u32 %s57, 1
        %s649 = smul.addr %s648, 32
        %s650 = scalar_lea.vmem [#allocation4], %s649
        %p651 = pneg %p70
        %p652 = pneg %p67
        %p653 = pneg %p91
        %p654 = pneg %p88
        %p655 = pneg %p112
        %p656 = pneg %p109
        %p657 = pneg %p133
        %p658 = pneg %p130
        %p659 = pneg %p154
        %p660 = pneg %p151
        %s661 = sand.u32 %s49, 1
        %s662 = scalar_lea.sflag [#allocation14], %s661
        %s663 = sand.u32 %s169, 1
        %s664 = smul.addr %s663, 128
        %s665 = scalar_lea.vmem [#allocation13], %s664
        %p666 = pneg %p182
        %p667 = pneg %p179
        %p668 = pneg %p203
        %p669 = pneg %p200
        %s670 = sld [smem:[#allocation3 + %s49]]
        %p671 = scmp.lt.s32.totalorder %s670, 4
        %s672 = scalar_select %p671, %s670, 4
        %s673 = scalar_lea.vmem %s8, %s672
        %p674 = pneg %p231
        %p675 = pneg %p228
        %s676 = sand.u32 %s49, 1
        %s677 = scalar_lea.sflag [#allocation17], %s676
        %s678 = sand.u32 %s246, 1
        %s679 = scalar_lea.vmem [#allocation16], %s678
        %p680 = pneg %p259
        %p681 = pneg %p256
        %s682 = sand.u32 %s49, 1
        %s683 = scalar_lea.sflag [#allocation17], %s682
        %s684 = sand.u32 %s274, 1
        %s685 = scalar_lea.vmem [#allocation18], %s684
        %p686 = pneg %p287
        %p687 = pneg %p284
        %s688 = sld [smem:[#allocation3 + %s49]]
        %p689 = scmp.lt.s32.totalorder %s688, 4
        %s690 = scalar_select %p689, %s688, 4
        %s691 = scalar_lea.vmem %s11, %s690
        %p692 = pneg %p315
        %p693 = pneg %p312
        %s694 = sand.u32 %s330, 1
        %s695 = scalar_lea.sflag [#allocation20], %s694
        %s696 = sand.u32 %s330, 1
        %s697 = scalar_lea.vmem [#allocation19], %s696
        %p698 = pneg %p343
        %p699 = pneg %p340
        %p700 = pneg %p369
        %p701 = pneg %p366
        %s702 = sand.u32 %s356, 1
        %s703 = scalar_lea.sflag [#allocation6], %s702
        %s704 = sand.u32 %s356, 1
        %s705 = smul.addr %s704, 32
        %s706 = scalar_lea.vmem [#allocation21], %s705
        %s707 = smul.u32 4, %s49
        %s708 = sld [smem:[#allocation3 + %s49]]
        %s709 = sld [smem:[#allocation3 + %s49]]
        %p710 = scmp.lt.s32.totalorder %s709, 4
        %s711 = scalar_select %p710, %s709, 4
        %s712 = scalar_lea.vmem %s8, %s711
        %s713 = sld [smem:[#allocation3 + %s49]]
        %s714 = sld [smem:[#allocation3 + %s49]]
        %s715 = sld [smem:[#allocation3 + %s49]]
        %s716 = sld [smem:[#allocation3 + %s49]]
        %p717 = scmp.lt.s32.totalorder %s716, 4
        %s718 = scalar_select %p717, %s716, 4
        %s719 = scalar_lea.vmem %s11, %s718
        %s720 = sld [smem:[#allocation3 + %s49]]
        %s721 = sld [smem:[#allocation3 + %s49]]
        %s722 = smul.u32 4, %s49
        %v723 = vld [vmem:[%s578] sm:$0xff]
        %v724 = vld [vmem:[%s578 + $0x8] sm:$0xff]
        %v725 = vld [vmem:[%s578 + $0x10] sm:$0xff]
        %v726 = vld [vmem:[%s578 + $0x18] sm:$0xff]
        %v727 = vld [vmem:[#allocation7] sm:$0xf]
        %v728 = vld [vmem:[#allocation7 + $0x4] sm:$0xf]
        %v729 = vld [vmem:[#allocation7 + $0x8] sm:$0xf]
        %v730 = vld [vmem:[#allocation7 + $0xc] sm:$0xf]
        %v731 = vld [vmem:[#allocation7 + $0x10] sm:$0xf]
        %v732 = vld [vmem:[#allocation7 + $0x14] sm:$0xf]
        %v733 = vld [vmem:[#allocation7 + $0x18] sm:$0xf]
        %v734 = vld [vmem:[#allocation7 + $0x1c] sm:$0xf]
        %v735 = vld [vmem:[#allocation7 + $0x20] sm:$0xf]
        %v736 = vld [vmem:[#allocation7 + $0x24] sm:$0xf]
        %v737 = vld [vmem:[#allocation7 + $0x28] sm:$0xf]
        %v738 = vld [vmem:[#allocation7 + $0x2c] sm:$0xf]
        %v739 = vld [vmem:[#allocation7 + $0x30] sm:$0xf]
        %v740 = vld [vmem:[#allocation7 + $0x34] sm:$0xf]
        %v741 = vld [vmem:[#allocation7 + $0x38] sm:$0xf]
        %v742 = vld [vmem:[#allocation7 + $0x3c] sm:$0xf]
        %v743 = vpack.c.bf16 %v724, %v723
        %v744 = vpack.c.bf16 %v726, %v725
        %v745 = vld [vmem:[#allocation9] sm:$0x1]
        %v747 = vperm.slane %v745, 0
        %v765 = vunpack.c.l.b16 %v727
        %v766 = vunpack.c.l.b16 %v728
        %v767 = vunpack.c.l.b16 %v729
        %v768 = vunpack.c.l.b16 %v730
        %v769 = vunpack.c.l.b16 %v731
        %v770 = vunpack.c.l.b16 %v732
        %v771 = vunpack.c.l.b16 %v733
        %v772 = vunpack.c.l.b16 %v734
        %v773 = vunpack.c.l.b16 %v735
        %v774 = vunpack.c.l.b16 %v736
        %v775 = vunpack.c.l.b16 %v737
        %v776 = vunpack.c.l.b16 %v738
        %v777 = vunpack.c.l.b16 %v739
        %v778 = vunpack.c.l.b16 %v740
        %v779 = vunpack.c.l.b16 %v741
        %v780 = vunpack.c.l.b16 %v742
        %v781 = vpack.c.b16 %v766, %v765
        %v782 = vpack.c.b16 %v768, %v767
        %v783 = vpack.c.b16 %v770, %v769
        %v784 = vpack.c.b16 %v772, %v771
        %v785 = vpack.c.b16 %v774, %v773
        %v786 = vpack.c.b16 %v776, %v775
        %v787 = vpack.c.b16 %v778, %v777
        %v788 = vpack.c.b16 %v780, %v779
        %797 = vmatpush.bf16.msra.mxu0 %v788
        %798 = vmatpush.bf16.msra.mxu0 %v787
        %799 = vmatpush.bf16.msra.mxu0 %v786
        %800 = vmatpush.bf16.msra.mxu0 %v785
        %801 = vmatpush.bf16.msra.mxu0 %v784
        %802 = vmatpush.bf16.msra.mxu0 %v783
        %803 = vmatpush.bf16.msra.mxu0 %v782
        %804 = vmatpush.bf16.msra.mxu0 %v781
        %805 = vmatmul.bf16.gmra.mxu0 %v743
        %v806 = vpop.f32.mrf.mxu0
        %v807 = vadd.f32 %v747, %v806
        %v808 = vpop.f32.mrf.mxu0
        %v809 = vadd.f32 %v747, %v808
        %810 = vmatmul.bf16.gmra.mxu0 %v744
        %v811 = vpop.f32.mrf.mxu0
        %v812 = vadd.f32 %v747, %v811
        %v813 = vpop.f32.mrf.mxu0
        %v814 = vadd.f32 %v747, %v813
        %815 = vdwg.mxu0
        %v816 = vmax.f32 %v807, 0.0
        %v817 = vmax.f32 %v809, 0.0
        %v818 = vmax.f32 %v812, 0.0
        %v819 = vmax.f32 %v814, 0.0
        %v820 = vld [vmem:[#allocation10] sm:$0xf]
        %v821 = vld [vmem:[#allocation10 + $0x4] sm:$0xf]
        %v822 = vld [vmem:[#allocation10 + $0x8] sm:$0xf]
        %v823 = vld [vmem:[#allocation10 + $0xc] sm:$0xf]
        %v824 = vld [vmem:[#allocation10 + $0x10] sm:$0xf]
        %v825 = vld [vmem:[#allocation10 + $0x14] sm:$0xf]
        %v826 = vld [vmem:[#allocation10 + $0x18] sm:$0xf]
        %v827 = vld [vmem:[#allocation10 + $0x1c] sm:$0xf]
        %v828 = vld [vmem:[#allocation10 + $0x20] sm:$0xf]
        %v829 = vld [vmem:[#allocation10 + $0x24] sm:$0xf]
        %v830 = vld [vmem:[#allocation10 + $0x28] sm:$0xf]
        %v831 = vld [vmem:[#allocation10 + $0x2c] sm:$0xf]
        %v832 = vld [vmem:[#allocation10 + $0x30] sm:$0xf]
        %v833 = vld [vmem:[#allocation10 + $0x34] sm:$0xf]
        %v834 = vld [vmem:[#allocation10 + $0x38] sm:$0xf]
        %v835 = vld [vmem:[#allocation10 + $0x3c] sm:$0xf]
        %v836 = vpack.c.bf16 %v817, %v816
        %v837 = vpack.c.bf16 %v819, %v818
        %v838 = vld [vmem:[#allocation12] sm:$0x1]
        %v840 = vperm.slane %v838, 0
        %v858 = vunpack.c.l.b16 %v820
        %v859 = vunpack.c.l.b16 %v821
        %v860 = vunpack.c.l.b16 %v822
        %v861 = vunpack.c.l.b16 %v823
        %v862 = vunpack.c.l.b16 %v824
        %v863 = vunpack.c.l.b16 %v825
        %v864 = vunpack.c.l.b16 %v826
        %v865 = vunpack.c.l.b16 %v827
        %v866 = vunpack.c.l.b16 %v828
        %v867 = vunpack.c.l.b16 %v829
        %v868 = vunpack.c.l.b16 %v830
        %v869 = vunpack.c.l.b16 %v831
        %v870 = vunpack.c.l.b16 %v832
        %v871 = vunpack.c.l.b16 %v833
        %v872 = vunpack.c.l.b16 %v834
        %v873 = vunpack.c.l.b16 %v835
        %v874 = vpack.c.b16 %v859, %v858
        %v875 = vpack.c.b16 %v861, %v860
        %v876 = vpack.c.b16 %v863, %v862
        %v877 = vpack.c.b16 %v865, %v864
        %v878 = vpack.c.b16 %v867, %v866
        %v879 = vpack.c.b16 %v869, %v868
        %v880 = vpack.c.b16 %v871, %v870
        %v881 = vpack.c.b16 %v873, %v872
        %890 = vmatpush.bf16.msra.mxu0 %v881
        %891 = vmatpush.bf16.msra.mxu0 %v880
        %892 = vmatpush.bf16.msra.mxu0 %v879
        %893 = vmatpush.bf16.msra.mxu0 %v878
        %894 = vmatpush.bf16.msra.mxu0 %v877
        %895 = vmatpush.bf16.msra.mxu0 %v876
        %896 = vmatpush.bf16.msra.mxu0 %v875
        %897 = vmatpush.bf16.msra.mxu0 %v874
        %898 = vmatmul.bf16.gmra.mxu0 %v836
        %v899 = vpop.f32.mrf.mxu0
        %v900 = vadd.f32 %v840, %v899
        %v901 = vpop.f32.mrf.mxu0
        %v902 = vadd.f32 %v840, %v901
        %903 = vmatmul.bf16.gmra.mxu0 %v837
        %v904 = vpop.f32.mrf.mxu0
        %v905 = vadd.f32 %v840, %v904
        %v906 = vpop.f32.mrf.mxu0
        %v907 = vadd.f32 %v840, %v906
        %908 = vdwg.mxu0
        %v909 = vmax.f32 %v900, 0.0
        %v910 = vmax.f32 %v902, 0.0
        %v911 = vmax.f32 %v905, 0.0
        %v912 = vmax.f32 %v907, 0.0
        %v913 = vpack.c.bf16 %v910, %v909
        %v914 = vpack.c.bf16 %v912, %v911
        %v915 = vld [vmem:[%s608] sm:$0xff]
        %v916 = vld [vmem:[%s608 + $0x8] sm:$0xff]
        %v917 = vld [vmem:[%s608 + $0x10] sm:$0xff]
        %v918 = vld [vmem:[%s608 + $0x18] sm:$0xff]
        %v919 = vld [vmem:[%s608 + $0x20] sm:$0xff]
        %v920 = vld [vmem:[%s608 + $0x28] sm:$0xff]
        %v921 = vld [vmem:[%s608 + $0x30] sm:$0xff]
        %v922 = vld [vmem:[%s608 + $0x38] sm:$0xff]
        %v923 = vld [vmem:[%s608 + $0x40] sm:$0xff]
        %v924 = vld [vmem:[%s608 + $0x48] sm:$0xff]
        %v925 = vld [vmem:[%s608 + $0x50] sm:$0xff]
        %v926 = vld [vmem:[%s608 + $0x58] sm:$0xff]
        %v927 = vld [vmem:[%s608 + $0x60] sm:$0xff]
        %v928 = vld [vmem:[%s608 + $0x68] sm:$0xff]
        %v929 = vld [vmem:[%s608 + $0x70] sm:$0xff]
        %v930 = vld [vmem:[%s608 + $0x78] sm:$0xff]
        %v947 = vunpack.c.l.b16 %v915
        %v948 = vunpack.c.h.b16 %v915
        %v949 = vunpack.c.l.b16 %v916
        %v950 = vunpack.c.h.b16 %v916
        %v951 = vunpack.c.l.b16 %v917
        %v952 = vunpack.c.h.b16 %v917
        %v953 = vunpack.c.l.b16 %v918
        %v954 = vunpack.c.h.b16 %v918
        %v955 = vunpack.c.l.b16 %v919
        %v956 = vunpack.c.h.b16 %v919
        %v957 = vunpack.c.l.b16 %v920
        %v958 = vunpack.c.h.b16 %v920
        %v959 = vunpack.c.l.b16 %v921
        %v960 = vunpack.c.h.b16 %v921
        %v961 = vunpack.c.l.b16 %v922
        %v962 = vunpack.c.h.b16 %v922
        %v963 = vunpack.c.l.b16 %v923
        %v964 = vunpack.c.h.b16 %v923
        %v965 = vunpack.c.l.b16 %v924
        %v966 = vunpack.c.h.b16 %v924
        %v967 = vunpack.c.l.b16 %v925
        %v968 = vunpack.c.h.b16 %v925
        %v969 = vunpack.c.l.b16 %v926
        %v970 = vunpack.c.h.b16 %v926
        %v971 = vunpack.c.l.b16 %v927
        %v972 = vunpack.c.h.b16 %v927
        %v973 = vunpack.c.l.b16 %v928
        %v974 = vunpack.c.h.b16 %v928
        %v975 = vunpack.c.l.b16 %v929
        %v976 = vunpack.c.h.b16 %v929
        %v977 = vunpack.c.l.b16 %v930
        %v978 = vunpack.c.h.b16 %v930
        %v979 = vpack.c.b16 %v949, %v947
        %v980 = vpack.c.b16 %v950, %v948
        %v981 = vpack.c.b16 %v953, %v951
        %v982 = vpack.c.b16 %v954, %v952
        %v983 = vpack.c.b16 %v957, %v955
        %v984 = vpack.c.b16 %v958, %v956
        %v985 = vpack.c.b16 %v961, %v959
        %v986 = vpack.c.b16 %v962, %v960
        %v987 = vpack.c.b16 %v965, %v963
        %v988 = vpack.c.b16 %v966, %v964
        %v989 = vpack.c.b16 %v969, %v967
        %v990 = vpack.c.b16 %v970, %v968
        %v991 = vpack.c.b16 %v973, %v971
        %v992 = vpack.c.b16 %v974, %v972
        %v993 = vpack.c.b16 %v977, %v975
        %v994 = vpack.c.b16 %v978, %v976
        %1011 = vmatpush.bf16.msra.mxu0 %v993
        %1012 = vmatpush.bf16.msra.mxu0 %v991
        %1013 = vmatpush.bf16.msra.mxu0 %v989
        %1014 = vmatpush.bf16.msra.mxu0 %v987
        %1015 = vmatpush.bf16.msra.mxu0 %v985
        %1016 = vmatpush.bf16.msra.mxu0 %v983
        %1017 = vmatpush.bf16.msra.mxu0 %v981
        %1018 = vmatpush.bf16.msra.mxu0 %v979
        %1019 = vmatmul.bf16.gmra.mxu0 %v913
        %v1020 = vpop.f32.mrf.mxu0
        %v1021 = vadd.f32 0.0, %v1020
        %v1022 = vpop.f32.mrf.mxu0
        %v1023 = vadd.f32 0.0, %v1022
        %1024 = vmatmul.bf16.gmra.mxu0 %v914
        %v1025 = vpop.f32.mrf.mxu0
        %v1026 = vadd.f32 0.0, %v1025
        %v1027 = vpop.f32.mrf.mxu0
        %v1028 = vadd.f32 0.0, %v1027
        %1029 = vdwg.mxu0
        %1030 = vmatpush.bf16.msra.mxu0 %v994
        %1031 = vmatpush.bf16.msra.mxu0 %v992
        %1032 = vmatpush.bf16.msra.mxu0 %v990
        %1033 = vmatpush.bf16.msra.mxu0 %v988
        %1034 = vmatpush.bf16.msra.mxu0 %v986
        %1035 = vmatpush.bf16.msra.mxu0 %v984
        %1036 = vmatpush.bf16.msra.mxu0 %v982
        %1037 = vmatpush.bf16.msra.mxu0 %v980
        %1038 = vmatmul.bf16.gmra.mxu0 %v913
        %v1039 = vpop.f32.mrf.mxu0
        %v1040 = vadd.f32 0.0, %v1039
        %v1041 = vpop.f32.mrf.mxu0
        %v1042 = vadd.f32 0.0, %v1041
        %1043 = vmatmul.bf16.gmra.mxu0 %v914
        %v1044 = vpop.f32.mrf.mxu0
        %v1045 = vadd.f32 0.0, %v1044
        %v1046 = vpop.f32.mrf.mxu0
        %v1047 = vadd.f32 0.0, %v1046
        %1048 = vdwg.mxu0
        %v1049 = vld [vmem:[#allocation15] sm:$0x1]
        %v1051 = vperm.slane %v1049, 0
        %v1053 = vadd.f32 %v1021, %v1051
        %v1054 = vadd.f32 %v1023, %v1051
        %v1055 = vadd.f32 %v1026, %v1051
        %v1056 = vadd.f32 %v1028, %v1051
        %1057 = vmax.xlane.f32.xlu0 %v1053
        %v1058 = vpop.xlane.xlu0 %1057
        %1059 = vmax.xlane.f32.xlu0 %v1054
        %v1060 = vpop.xlane.xlu0 %1059
        %1061 = vmax.xlane.f32.xlu0 %v1055
        %v1062 = vpop.xlane.xlu0 %1061
        %1063 = vmax.xlane.f32.xlu0 %v1056
        %v1064 = vpop.xlane.xlu0 %1063
        %v1065 = vsub.f32 %v1053, %v1058
        %v1066 = vsub.f32 %v1054, %v1060
        %v1067 = vsub.f32 %v1055, %v1062
        %v1068 = vsub.f32 %v1056, %v1064
        %v1069 = vmul.f32 %v1065, 1.442695
        %v1070 = vpow.pop %v1069
        %v1071 = vmul.f32 %v1066, 1.442695
        %v1072 = vpow.pop %v1071
        %v1073 = vmul.f32 %v1067, 1.442695
        %v1074 = vpow.pop %v1073
        %v1075 = vmul.f32 %v1068, 1.442695
        %v1076 = vpow.pop %v1075
        %1077 = vadd.xlane.f32.xlu0 %v1070
        %v1078 = vpop.xlane.xlu0 %1077
        %1079 = vadd.xlane.f32.xlu0 %v1072
        %v1080 = vpop.xlane.xlu0 %1079
        %1081 = vadd.xlane.f32.xlu0 %v1074
        %v1082 = vpop.xlane.xlu0 %1081
        %1083 = vadd.xlane.f32.xlu0 %v1076
        %v1084 = vpop.xlane.xlu0 %1083
        %v1085 = vmul.f32 %v723, 10.0
        %v1086 = vmul.f32 %v724, 10.0
        %v1087 = vmul.f32 %v725, 10.0
        %v1088 = vmul.f32 %v726, 10.0
        %v1089 = vceil.f32 %v1085
        %v1090 = vceil.f32 %v1086
        %v1091 = vceil.f32 %v1087
        %v1092 = vceil.f32 %v1088
        %v1093 = vsub.f32 %v1089, %v1085
        %v1094 = vsub.f32 %v1090, %v1086
        %v1095 = vsub.f32 %v1091, %v1087
        %v1096 = vsub.f32 %v1092, %v1088
        %v1097 = vsub.f32 1.0, %v1093
        %v1098 = vsub.f32 1.0, %v1094
        %v1099 = vsub.f32 1.0, %v1095
        %v1100 = vsub.f32 1.0, %v1096
        %v1101 = vsub.f32 %v1089, 1.0
        %v1102 = vsub.f32 %v1090, 1.0
        %v1103 = vsub.f32 %v1091, 1.0
        %v1104 = vsub.f32 %v1092, 1.0
        %vm1105 = vcmp.lt.f32.partialorder %v1101, 0.0
        %vm1106 = vcmp.lt.f32.partialorder %v1102, 0.0
        %vm1107 = vcmp.lt.f32.partialorder %v1103, 0.0
        %vm1108 = vcmp.lt.f32.partialorder %v1104, 0.0
        %v1109 = vadd.f32 %v1101, 1.0
        %v1110 = vadd.f32 %v1102, 1.0
        %v1111 = vadd.f32 %v1103, 1.0
        %v1112 = vadd.f32 %v1104, 1.0
        %v1113 = vsel %vm1105, %v1109, %v1101
        %v1114 = vsel %vm1106, %v1110, %v1102
        %v1115 = vsel %vm1107, %v1111, %v1103
        %v1116 = vsel %vm1108, %v1112, %v1104
        %v1117 = vlaneseq
        %v1118 = vand.u32 %v1117, 127
        %v1119 = vcvt.f32.s32.to.zero.pseudo %v1113
        %v1120 = vcvt.f32.s32.to.zero.pseudo %v1114
        %v1121 = vcvt.f32.s32.to.zero.pseudo %v1115
        %v1122 = vcvt.f32.s32.to.zero.pseudo %v1116
        %v1123 = vcvt.f32.s32.to.zero.pseudo %v1089
        %v1124 = vcvt.f32.s32.to.zero.pseudo %v1090
        %v1125 = vcvt.f32.s32.to.zero.pseudo %v1091
        %v1126 = vcvt.f32.s32.to.zero.pseudo %v1092
        %1127 = vset.pattern.permute.xlu0 0
        %1128 = vperm.xlu0 %1127, %v1119
        %v1129 = vpop.permute.xlu0 %1128
        %1130 = vset.pattern.permute.xlu0 0
        %1131 = vperm.xlu0 %1130, %v1120
        %v1132 = vpop.permute.xlu0 %1131
        %1133 = vset.pattern.permute.xlu0 0
        %1134 = vperm.xlu0 %1133, %v1121
        %v1135 = vpop.permute.xlu0 %1134
        %1136 = vset.pattern.permute.xlu0 0
        %1137 = vperm.xlu0 %1136, %v1122
        %v1138 = vpop.permute.xlu0 %1137
        %vm1139 = vcmp.eq.s32.totalorder %v1118, %v1129
        %vm1140 = vcmp.eq.s32.totalorder %v1118, %v1132
        %vm1141 = vcmp.eq.s32.totalorder %v1118, %v1135
        %vm1142 = vcmp.eq.s32.totalorder %v1118, %v1138
        %v1143 = vsub.f32 1.0, %v1097
        %v1144 = vsub.f32 1.0, %v1098
        %v1145 = vsub.f32 1.0, %v1099
        %v1146 = vsub.f32 1.0, %v1100
        %1148 = vset.pattern.permute.xlu0 0
        %1149 = vperm.xlu0 %1148, %v1143
        %v1150 = vpop.permute.xlu0 %1149
        %1153 = vset.pattern.permute.xlu0 0
        %1154 = vperm.xlu0 %1153, %v1144
        %v1155 = vpop.permute.xlu0 %1154
        %1158 = vset.pattern.permute.xlu0 0
        %1159 = vperm.xlu0 %1158, %v1145
        %v1160 = vpop.permute.xlu0 %1159
        %1163 = vset.pattern.permute.xlu0 0
        %1164 = vperm.xlu0 %1163, %v1146
        %v1165 = vpop.permute.xlu0 %1164
        %v1167 = vsel %vm1139, %v1150, 0.0
        %v1168 = vsel %vm1140, %v1155, 0.0
        %v1169 = vsel %vm1141, %v1160, 0.0
        %v1170 = vsel %vm1142, %v1165, 0.0
        %1171 = vset.pattern.permute.xlu0 0
        %1172 = vperm.xlu0 %1171, %v1123
        %v1173 = vpop.permute.xlu0 %1172
        %1174 = vset.pattern.permute.xlu0 0
        %1175 = vperm.xlu0 %1174, %v1124
        %v1176 = vpop.permute.xlu0 %1175
        %1177 = vset.pattern.permute.xlu0 0
        %1178 = vperm.xlu0 %1177, %v1125
        %v1179 = vpop.permute.xlu0 %1178
        %1180 = vset.pattern.permute.xlu0 0
        %1181 = vperm.xlu0 %1180, %v1126
        %v1182 = vpop.permute.xlu0 %1181
        %vm1183 = vcmp.eq.s32.totalorder %v1118, %v1173
        %vm1184 = vcmp.eq.s32.totalorder %v1118, %v1176
        %vm1185 = vcmp.eq.s32.totalorder %v1118, %v1179
        %vm1186 = vcmp.eq.s32.totalorder %v1118, %v1182
        %1188 = vset.pattern.permute.xlu0 0
        %1189 = vperm.xlu0 %1188, %v1097
        %v1190 = vpop.permute.xlu0 %1189
        %1193 = vset.pattern.permute.xlu0 0
        %1194 = vperm.xlu0 %1193, %v1098
        %v1195 = vpop.permute.xlu0 %1194
        %1198 = vset.pattern.permute.xlu0 0
        %1199 = vperm.xlu0 %1198, %v1099
        %v1200 = vpop.permute.xlu0 %1199
        %1203 = vset.pattern.permute.xlu0 0
        %1204 = vperm.xlu0 %1203, %v1100
        %v1205 = vpop.permute.xlu0 %1204
        %v1207 = vsel %vm1183, %v1190, 0.0
        %v1208 = vsel %vm1184, %v1195, 0.0
        %v1209 = vsel %vm1185, %v1200, 0.0
        %v1210 = vsel %vm1186, %v1205, 0.0
        %v1211 = vadd.f32 %v1167, %v1207
        %v1212 = vadd.f32 %v1168, %v1208
        %v1213 = vadd.f32 %v1169, %v1209
        %v1214 = vadd.f32 %v1170, %v1210
        %v1215 = vmul.f32 %v1070, %v1211
        %v1216 = vmul.f32 %v1072, %v1212
        %v1217 = vmul.f32 %v1074, %v1213
        %v1218 = vmul.f32 %v1076, %v1214
        %1219 = vadd.xlane.f32.xlu0 %v1215
        %v1220 = vpop.xlane.xlu0 %1219
        %1221 = vadd.xlane.f32.xlu0 %v1216
        %v1222 = vpop.xlane.xlu0 %1221
        %1223 = vadd.xlane.f32.xlu0 %v1217
        %v1224 = vpop.xlane.xlu0 %1223
        %1225 = vadd.xlane.f32.xlu0 %v1218
        %v1226 = vpop.xlane.xlu0 %1225
        %v1227 = vrcp.pop %v1078
        %v1228 = vmul.f32 %v1078, %v1227
        %v1229 = vsub.f32 1.0, %v1228
        %v1230 = vmul.f32 %v1227, %v1229
        %v1231 = vadd.f32 %v1227, %v1230
        %vm1232 = vweird.f32 %v1078
        %vm1233 = vweird.f32 %v1227
        %vm1234 = vmor %vm1232, %vm1233
        %v1235 = vsel %vm1234, %v1227, %v1231
        %v1236 = vand.u32 2147483647, %v1078
        %vm1237 = vcmp.eq.f32.partialorder %v1236, 8.507059e+37
        %v1238 = vand.u32 %v1078, 2147483648
        %v1239 = vor.u32 1.1754944e-38, %v1238
        %v1240 = vsel %vm1237, %v1239, %v1235
        %v1241 = vmul.f32 %v1220, %v1240
        %v1242 = vrcp.pop %v1080
        %v1243 = vmul.f32 %v1080, %v1242
        %v1244 = vsub.f32 1.0, %v1243
        %v1245 = vmul.f32 %v1242, %v1244
        %v1246 = vadd.f32 %v1242, %v1245
        %vm1247 = vweird.f32 %v1080
        %vm1248 = vweird.f32 %v1242
        %vm1249 = vmor %vm1247, %vm1248
        %v1250 = vsel %vm1249, %v1242, %v1246
        %v1251 = vand.u32 2147483647, %v1080
        %vm1252 = vcmp.eq.f32.partialorder %v1251, 8.507059e+37
        %v1253 = vand.u32 %v1080, 2147483648
        %v1254 = vor.u32 1.1754944e-38, %v1253
        %v1255 = vsel %vm1252, %v1254, %v1250
        %v1256 = vmul.f32 %v1222, %v1255
        %v1257 = vrcp.pop %v1082
        %v1258 = vmul.f32 %v1082, %v1257
        %v1259 = vsub.f32 1.0, %v1258
        %v1260 = vmul.f32 %v1257, %v1259
        %v1261 = vadd.f32 %v1257, %v1260
        %vm1262 = vweird.f32 %v1082
        %vm1263 = vweird.f32 %v1257
        %vm1264 = vmor %vm1262, %vm1263
        %v1265 = vsel %vm1264, %v1257, %v1261
        %v1266 = vand.u32 2147483647, %v1082
        %vm1267 = vcmp.eq.f32.partialorder %v1266, 8.507059e+37
        %v1268 = vand.u32 %v1082, 2147483648
        %v1269 = vor.u32 1.1754944e-38, %v1268
        %v1270 = vsel %vm1267, %v1269, %v1265
        %v1271 = vmul.f32 %v1224, %v1270
        %v1272 = vrcp.pop %v1084
        %v1273 = vmul.f32 %v1084, %v1272
        %v1274 = vsub.f32 1.0, %v1273
        %v1275 = vmul.f32 %v1272, %v1274
        %v1276 = vadd.f32 %v1272, %v1275
        %vm1277 = vweird.f32 %v1084
        %vm1278 = vweird.f32 %v1272
        %vm1279 = vmor %vm1277, %vm1278
        %v1280 = vsel %vm1279, %v1272, %v1276
        %v1281 = vand.u32 2147483647, %v1084
        %vm1282 = vcmp.eq.f32.partialorder %v1281, 8.507059e+37
        %v1283 = vand.u32 %v1084, 2147483648
        %v1284 = vor.u32 1.1754944e-38, %v1283
        %v1285 = vsel %vm1282, %v1284, %v1280
        %v1286 = vmul.f32 %v1226, %v1285
        %v1287 = vld [vmem:[%s712] sm:$0x1]
        %1289 = vset.pattern.permute.xlu0 0
        %1290 = vperm.xlu0 %1289, %v723
        %v1291 = vpop.permute.xlu0 %1290
        %1294 = vset.pattern.permute.xlu0 0
        %1295 = vperm.xlu0 %1294, %v724
        %v1296 = vpop.permute.xlu0 %1295
        %1299 = vset.pattern.permute.xlu0 0
        %1300 = vperm.xlu0 %1299, %v725
        %v1301 = vpop.permute.xlu0 %1300
        %1304 = vset.pattern.permute.xlu0 0
        %1305 = vperm.xlu0 %1304, %v726
        %v1306 = vpop.permute.xlu0 %1305
        %v1309 = vperm.slane %v1287, 0
        %v1311 = vmul.f32 %v1291, %v1309
        %v1312 = vmul.f32 %v1296, %v1309
        %v1313 = vmul.f32 %v1301, %v1309
        %v1314 = vmul.f32 %v1306, %v1309
        %v1315 = vadd.f32 %v1040, %v1311
        %v1316 = vadd.f32 %v1042, %v1312
        %v1317 = vadd.f32 %v1045, %v1313
        %v1318 = vadd.f32 %v1047, %v1314
        %v1319 = vld [vmem:[%s622] sm:$0x1]
        %v1321 = vperm.slane %v1319, 0
        %v1323 = vadd.f32 %v1315, %v1321
        %v1324 = vadd.f32 %v1316, %v1321
        %v1325 = vadd.f32 %v1317, %v1321
        %v1326 = vadd.f32 %v1318, %v1321
        %v1327 = vmax.f32 %v1323, 0.0
        %v1328 = vmax.f32 %v1324, 0.0
        %v1329 = vmax.f32 %v1325, 0.0
        %v1330 = vmax.f32 %v1326, 0.0
        %v1331 = vld [vmem:[%s631] sm:$0x1]
        %v1333 = vperm.slane %v1331, 0
        %v1335 = vmul.f32 %v1327, %v1333
        %v1336 = vmul.f32 %v1328, %v1333
        %v1337 = vmul.f32 %v1329, %v1333
        %v1338 = vmul.f32 %v1330, %v1333
        %1339 = vadd.xlane.f32.xlu0 %v1335
        %v1340 = vpop.xlane.xlu0 %1339
        %1341 = vadd.xlane.f32.xlu0 %v1336
        %v1342 = vpop.xlane.xlu0 %1341
        %1343 = vadd.xlane.f32.xlu0 %v1337
        %v1344 = vpop.xlane.xlu0 %1343
        %1345 = vadd.xlane.f32.xlu0 %v1338
        %v1346 = vpop.xlane.xlu0 %1345
        %v1347 = vld [vmem:[%s719] sm:$0x1]
        %v1349 = vperm.slane %v1347, 0
        %v1351 = vmul.f32 %v723, %v1349
        %v1352 = vmul.f32 %v724, %v1349
        %v1353 = vmul.f32 %v725, %v1349
        %v1354 = vmul.f32 %v726, %v1349
        %v1355 = vadd.f32 %v1340, %v1351
        %v1356 = vadd.f32 %v1342, %v1352
        %v1357 = vadd.f32 %v1344, %v1353
        %v1358 = vadd.f32 %v1346, %v1354
        %v1359 = vld [vmem:[%s640] sm:$0x1]
        %v1361 = vperm.slane %v1359, 0
        %v1363 = vadd.f32 %v1355, %v1361
        %v1364 = vadd.f32 %v1356, %v1361
        %v1365 = vadd.f32 %v1357, %v1361
        %v1366 = vadd.f32 %v1358, %v1361
        %vm1367 = vcmp.eq.s32.totalorder %v1118, 0
        %1369 = vset.pattern.permute.xlu0 0
        %1370 = vperm.xlu0 %1369, %v1363
        %v1371 = vpop.permute.xlu0 %1370
        %1374 = vset.pattern.permute.xlu0 0
        %1375 = vperm.xlu0 %1374, %v1364
        %v1376 = vpop.permute.xlu0 %1375
        %1379 = vset.pattern.permute.xlu0 0
        %1380 = vperm.xlu0 %1379, %v1365
        %v1381 = vpop.permute.xlu0 %1380
        %1384 = vset.pattern.permute.xlu0 0
        %1385 = vperm.xlu0 %1384, %v1366
        %v1386 = vpop.permute.xlu0 %1385
        %v1388 = vsel %vm1367, %v1371, 0.0
        %v1389 = vsel %vm1367, %v1376, 0.0
        %v1390 = vsel %vm1367, %v1381, 0.0
        %v1391 = vsel %vm1367, %v1386, 0.0
        %vm1392 = vcmp.eq.s32.totalorder %v1118, 1
        %v1393 = vsel %vm1392, %v1241, %v1388
        %v1394 = vsel %vm1392, %v1256, %v1389
        %v1395 = vsel %vm1392, %v1271, %v1390
        %v1396 = vsel %vm1392, %v1286, %v1391
        %1397 = vst [vmem:[%s706] sm:$0xff] %v1393
        %1398 = vst [vmem:[%s706 + $0x8] sm:$0xff] %v1394
        %1399 = vst [vmem:[%s706 + $0x10] sm:$0xff] %v1395
        %1400 = vst [vmem:[%s706 + $0x18] sm:$0xff] %v1396
        %s1401 = sand.u32 %s356, 1
        %s1402 = scalar_lea.sflag [#allocation6], %s1401
        %s1403 = sand.u32 %s356, 1
        %s1404 = smul.addr %s1403, 32
        %s1405 = scalar_lea.vmem [#allocation21], %s1404
        // Predicated region
        $region109: #{tpu_custom_call.1} parent=67 // pred_check
          %p1406 = pneg %p366
        $region110: #{tpu_custom_call.1} parent=67 // pred_check_branch
          %1408 = sbr.rel (%p1406) target = $region112
        $region111: #{tpu_custom_call.1} parent=67 // pred_region
          %s1409 = smul.u32 4, %s49
          %1411 = vsyncadd %s1402, 0
          %s1412 = smul.addr %s1409, 8
          %s1413 = scalar_lea.hbm %s13, %s1412
          %s1414 = sshll.u32 %s1405, 4
          %s1415 = int_to_ptr.vmem [resolvable:$true] %s1414
          %s1416 = sshll.u32 %s1413, 4
          %s1417 = int_to_ptr.hbm [resolvable:$true] %s1416
          %1422 = dma.vmem_to_hbm [thread:$0]  %s1415, 512, %s1417, %s1402, 128, 128, 8
        $region112: #{tpu_custom_call.1} parent=67 // pred_fallthru
          _
      $region68: #{tpu_custom_call.1} parent=5 // pred_fallthru
        _
      %p1423 = scmp.le.s32.totalorder 2, %s44
      // Predicated region
      $region113: #{tpu_custom_call.1} parent=5 // pred_check
        %p1424 = pneg %p1423
      $region114: #{tpu_custom_call.1} parent=5 // pred_check_branch
        %1426 = sbr.rel (%p1424) target = $region116
      $region115: #{tpu_custom_call.1} parent=5 // pred_region
        %s1427 = ssub.s32 %s44, 2
        // Predicated region
        $region117: #{tpu_custom_call.1} parent=115 // pred_check
          %p1428 = pneg %p372
        $region118: #{tpu_custom_call.1} parent=115 // pred_check_branch
          %1430 = sbr.rel (%p1428) target = $region120
        $region119: #{tpu_custom_call.1} parent=115 // pred_region
          %s1431 = sand.u32 %s357, 1
          %s1432 = scalar_lea.sflag [#allocation6], %s1431
          %s1433 = sand.u32 %s357, 1
          %s1434 = smul.addr %s1433, 32
          %s1435 = scalar_lea.vmem [#allocation21], %s1434
          %1437 = dma.done %s1432, 512
        $region120: #{tpu_custom_call.1} parent=115 // pred_fallthru
          _
      $region116: #{tpu_custom_call.1} parent=5 // pred_fallthru
        _
    $region6: #{tpu_custom_call.1} parent=1 // loop_footer
      %s48 = sadd.s32 1, %s44
    $region7: #{tpu_custom_call.1} parent=1 // loop_footer_branch
      %43 = sbr.rel target = $region3
    $region8: #{tpu_custom_call.1} parent=1 // loop_exit
      _
    %1438 = vsyncpa [#allocation5], 1
    %s1439 = scalar_lea.sflag [#allocation5], 1
    %1440 = vsyncpa %s1439, 1
    %1441 = vsyncpa [#allocation8], 1
    %1442 = vsyncpa [#allocation11], 1
    %1443 = vsyncpa [#allocation14], 1
    %s1444 = scalar_lea.sflag [#allocation14], 1
    %1445 = vsyncpa %s1444, 1
    %1446 = vsyncpa [#allocation17], 1
    %s1447 = scalar_lea.sflag [#allocation17], 1
    %1448 = vsyncpa %s1447, 1
    %1449 = vsyncpa [#allocation20], 1
    %s1450 = scalar_lea.sflag [#allocation20], 1
    %1451 = vsyncpa %s1450, 1
    %1452 = vsyncpa [#allocation6], 1
    %s1453 = scalar_lea.sflag [#allocation6], 1
    %1454 = vsyncpa %s1453, 1

</llo_original>
